<compile_context>
chip_gen: v7x
topology: tpu7x:2x2x1
jax: 0.10.0
libtpu: 0.0.40
codegen_flags: <defaults>
</compile_context>

<pallas_src>
import functools

import jax
import jax.numpy as jnp
from jax.experimental import pallas as pl
from jax.experimental.pallas import tpu as pltpu

EPS = 1e-07

# VMEM budget (bytes) for the double-buffered z-in / y-out streams.  Kept well
# under the default scoped-VMEM limit of every TPU generation
# (v5e: 16 MiB, v6e/v7x: 32 MiB); we also raise the limit explicitly to
# 32 MiB, which is valid on all of them (v7x physical VMEM is 64 MiB).
_STREAM_VMEM_BUDGET = 12 * 1024 * 1024
_VMEM_LIMIT_BYTES = 32 * 1024 * 1024
# >=512-row tiles already reach ~85% of HBM roofline (measured v6e); capping
# at 512 (instead of 1024+) keeps more grid steps so the parallel grid axis
# can be sharded across both TensorCores on v7x.
_MAX_TILE_N = 512


def _round_up(x, m):
    return ((x + m - 1) // m) * m


def _choose_tile_n(n, d, itemsize):
    # Double-buffered input (z) + output (y): 2 * 2 * tile_n * d * itemsize.
    per_row = 4 * d * itemsize
    t = max(8, min(_STREAM_VMEM_BUDGET // per_row, _MAX_TILE_N))
    t = (t // 8) * 8                      # sublane multiple of 8
    t = min(t, _round_up(n, 8))           # don't tile far past the batch
    return int(max(t, 8))


def _radial_fwd_kernel(ab_ref, z0_ref, z_ref, y_ref, logdet_ref, *, d):
    # ab_ref: SMEM (2,) holding [a, b]
    a = ab_ref[0]
    b = ab_ref[1]

    z = z_ref[...].astype(jnp.float32)        # (TN, d)
    z0 = z0_ref[...].astype(jnp.float32)      # (1, d), block-resident

    z_z0 = z - z0                             # broadcast over batch rows
    # row-wise L2 norm (reduction over the lane/feature axis)
    r = jnp.sqrt(jnp.sum(z_z0 * z_z0, axis=1, keepdims=True)) + EPS  # (TN, 1)

    # h = 1/(a+r), hprime = -h^2, so
    #   1 + b*h + b*hprime*r == 1 + b*h*(1 - h*r) == 1 + a*b*h*h
    # (algebraic fold removes one divide and one mul).  We keep the *exact*
    # reciprocal: pl.reciprocal(approx=True) may exceed the 1e-5 tolerance
    # vs. the reference on some generations.
    h = 1.0 / (a + r)
    bh = b * h
    logdet = (d - 1.0) * jnp.log(1.0 + bh) + jnp.log(1.0 + a * bh * h)

    y_ref[...] = (z + b * z_z0 * h).astype(y_ref.dtype)
    logdet_ref[...] = logdet.astype(logdet_ref.dtype)


def radial_flow_forward(z, z0, log_a, bhat, *, tile_n=None):
    """Pallas implementation of RadialFlow.forward(input, mode='forward').

    z:     (N, d)
    z0:    (1, d) parameter
    log_a: (1, 1) parameter
    bhat:  (1, 1) parameter
    returns (y: (N, d), logdet: (N,) float32)
    """
    N, d = z.shape
    itemsize = jnp.dtype(z.dtype).itemsize
    if tile_n is None:
        tile_n = _choose_tile_n(N, d, itemsize)
    assert tile_n % 8 == 0

    # Ragged batch: pad rows up to a multiple of tile_n, slice results back.
    n_pad = _round_up(N, tile_n)
    z_in = jnp.pad(z, ((0, n_pad - N), (0, 0))) if n_pad != N else z

    # Scalar parameter glue (matches the PyTorch reference exactly).
    bhat_eff = bhat + jnp.log(jnp.exp(jnp.ones((1, 1), jnp.float32)) -
                              jnp.ones((1, 1), jnp.float32))
    a = jnp.exp(log_a)                                     # (1, 1)
    b = -a + jax.nn.softplus(bhat_eff)                     # (1, 1)
    ab = jnp.concatenate([a.reshape(-1), b.reshape(-1)])   # (2,) -> SMEM

    kernel = functools.partial(_radial_fwd_kernel, d=float(d))

    y, logdet2d = pl.pallas_call(
        kernel,
        out_shape=(
            jax.ShapeDtypeStruct((n_pad, d), z.dtype),
            jax.ShapeDtypeStruct((n_pad, 1), jnp.float32),
        ),
        grid_spec=pltpu.PrefetchScalarGridSpec(
            num_scalar_prefetch=0,
            grid=(n_pad // tile_n,),
            in_specs=[
                pl.BlockSpec(memory_space=pltpu.MemorySpace.SMEM),   # [a, b]
                pl.BlockSpec((1, d), lambda i: (0, 0)),              # z0 (resident)
                pl.BlockSpec((tile_n, d), lambda i: (i, 0)),         # z
            ],
            out_specs=[
                pl.BlockSpec((tile_n, d), lambda i: (i, 0)),         # y
                # Per-row scalars stay as a width-1 column (same pattern as
                # flash-attention LSE): the sublane->lane relayout needed for
                # a lane-dense (1, tile_n) store is not reliably lowerable
                # in-kernel, and logdet is secondary traffic vs. y.
                pl.BlockSpec((tile_n, 1), lambda i: (i, 0)),         # logdet
            ],
        ),
        compiler_params=pltpu.CompilerParams(
            dimension_semantics=("parallel",),   # lets v7x shard steps over 2 TCs
            vmem_limit_bytes=_VMEM_LIMIT_BYTES,
        ),
        # TODO(synk): if the caller does not need z afterwards, pass
        # input_output_aliases={2: 0} so y reuses z's HBM buffer.
    )(ab, z0, z_in)

    if n_pad != N:
        y = y[:N]
        logdet2d = logdet2d[:N]
    return y, logdet2d.reshape(-1)


def radial_flow_forward_ref(z, z0, log_a, bhat):
    """Pure-JAX reference matching the PyTorch module."""
    bhat_eff = bhat + jnp.log(jnp.exp(jnp.ones((1, 1))) - jnp.ones((1, 1)))
    d = float(z.shape[1])
    a = jnp.exp(log_a)
    b = -a + jax.nn.softplus(bhat_eff)
    z_z0 = z - z0
    r = jnp.linalg.norm(z_z0, axis=1, keepdims=True) + EPS
    h = 1.0 / (a + r)
    hprime = -1.0 / (a + r) ** 2
    logdet = (d - 1.0) * jnp.log(1.0 + b * h) + jnp.log(1.0 + b * h + b * hprime * r)
    y = z + b * z_z0 * h
    return y, logdet.reshape(-1)


if __name__ == "__main__":
    # Small but representative shapes: lane-dense feature dim (d=128) and a
    # ragged batch (N=1000) that exercises the padding path and a 2-step grid.
    # (For very small d, e.g. d=16, only a fraction of the 128 lanes would be
    # used and plain XLA is a better fit.)
    N, d = 1000, 128

    key = jax.random.PRNGKey(0)
    kz, kz0 = jax.random.split(key)

    # Deterministic synthetic parameters (module __init__ shapes).
    z0 = 0.1 * jax.random.normal(kz0, (1, d), dtype=jnp.float32)
    log_a = jnp.full((1, 1), 0.1, dtype=jnp.float32)
    bhat = jnp.full((1, 1), 0.2, dtype=jnp.float32)

    # Example input.
    z = jax.random.normal(kz, (N, d), dtype=jnp.float32)

    y, logdet = radial_flow_forward(z, z0, log_a, bhat)
    jax.block_until_ready((y, logdet))

    # Cross-check against the pure-JAX reference.
    y_ref, logdet_ref = radial_flow_forward_ref(z, z0, log_a, bhat)
    assert y.shape == (N, d) and logdet.shape == (N,)
    assert jnp.allclose(y, y_ref, atol=1e-5, rtol=1e-5)
    assert jnp.allclose(logdet, logdet_ref, atol=1e-5, rtol=1e-5)

    print("KERNEL_OK")
</pallas_src>

<mosaic_0001>
module attributes {stable_mosaic.version = 11 : i64} {
  func.func @_radial_fwd_kernel(%arg0: i32, %arg1: memref<2xf32, #tpu.memory_space<smem>>, %arg2: memref<1x128xf32, #tpu.memory_space<vmem>>, %arg3: memref<512x128xf32, #tpu.memory_space<vmem>>, %arg4: memref<512x128xf32, #tpu.memory_space<vmem>>, %arg5: memref<512x1xf32, #tpu.memory_space<vmem>>) attributes {dimension_semantics = [#tpu.dimension_semantics<parallel>], iteration_bounds = array<i64: 2>, scalar_prefetch = 0 : i64, scratch_operands = 0 : i64, tpu.core_type = #tpu.core_type<tc>, window_params = [{transform_indices = @transform_0, window_bounds = array<i64: 2>}, {pipeline_mode = #tpu.pipeline_mode<synchronous>, transform_indices = @transform_1, window_bounds = array<i64: 1, 128>}, {transform_indices = @transform_2, window_bounds = array<i64: 512, 128>}, {transform_indices = @transform_3, window_bounds = array<i64: 512, 128>}, {transform_indices = @transform_4, window_bounds = array<i64: 512, 1>}]} {
    %c0 = arith.constant 0 : index
    %0 = memref.load %arg1[%c0] : memref<2xf32, #tpu.memory_space<smem>>
    %c1 = arith.constant 1 : index
    %1 = memref.load %arg1[%c1] : memref<2xf32, #tpu.memory_space<smem>>
    %c0_0 = arith.constant 0 : index
    %c0_1 = arith.constant 0 : index
    %2 = vector.load %arg3[%c0_0, %c0_1] : memref<512x128xf32, #tpu.memory_space<vmem>>, vector<512x128xf32>
    %c0_2 = arith.constant 0 : index
    %c0_3 = arith.constant 0 : index
    %3 = vector.load %arg2[%c0_2, %c0_3] : memref<1x128xf32, #tpu.memory_space<vmem>>, vector<1x128xf32>
    %4 = vector.broadcast %3 : vector<1x128xf32> to vector<512x128xf32>
    %5 = arith.subf %2, %4 : vector<512x128xf32>
    %6 = arith.mulf %5, %5 : vector<512x128xf32>
    %cst = arith.constant dense<0.000000e+00> : vector<512xf32>
    %7 = vector.multi_reduction <add>, %6, %cst [1] : vector<512x128xf32> to vector<512xf32>
    %8 = vector.shape_cast %7 : vector<512xf32> to vector<512x1xf32>
    %9 = math.sqrt %8 : vector<512x1xf32>
    %cst_4 = arith.constant 1.000000e-07 : f32
    %10 = vector.broadcast %cst_4 : f32 to vector<512x1xf32>
    %11 = arith.addf %9, %10 : vector<512x1xf32>
    %12 = vector.broadcast %0 : f32 to vector<512x1xf32>
    %13 = arith.addf %12, %11 : vector<512x1xf32>
    %cst_5 = arith.constant 1.000000e+00 : f32
    %14 = vector.broadcast %cst_5 : f32 to vector<512x1xf32>
    %15 = arith.divf %14, %13 : vector<512x1xf32>
    %16 = vector.broadcast %1 : f32 to vector<512x1xf32>
    %17 = arith.mulf %16, %15 : vector<512x1xf32>
    %cst_6 = arith.constant 1.000000e+00 : f32
    %18 = vector.broadcast %cst_6 : f32 to vector<512x1xf32>
    %19 = arith.addf %18, %17 : vector<512x1xf32>
    %20 = math.log %19 : vector<512x1xf32>
    %cst_7 = arith.constant 1.270000e+02 : f32
    %21 = vector.broadcast %cst_7 : f32 to vector<512x1xf32>
    %22 = arith.mulf %21, %20 : vector<512x1xf32>
    %23 = vector.broadcast %0 : f32 to vector<512x1xf32>
    %24 = arith.mulf %23, %17 : vector<512x1xf32>
    %25 = arith.mulf %24, %15 : vector<512x1xf32>
    %cst_8 = arith.constant 1.000000e+00 : f32
    %26 = vector.broadcast %cst_8 : f32 to vector<512x1xf32>
    %27 = arith.addf %26, %25 : vector<512x1xf32>
    %28 = math.log %27 : vector<512x1xf32>
    %29 = arith.addf %22, %28 : vector<512x1xf32>
    %30 = vector.broadcast %1 : f32 to vector<512x128xf32>
    %31 = arith.mulf %30, %5 : vector<512x128xf32>
    %32 = vector.broadcast %15 : vector<512x1xf32> to vector<512x128xf32>
    %33 = arith.mulf %31, %32 : vector<512x128xf32>
    %34 = arith.addf %2, %33 : vector<512x128xf32>
    %c0_9 = arith.constant 0 : index
    %c0_10 = arith.constant 0 : index
    %35 = vector.load %arg4[%c0_9, %c0_10] : memref<512x128xf32, #tpu.memory_space<vmem>>, vector<512x128xf32>
    tpu.vector_store %arg4[%c0_9, %c0_10], %34 {strides = array<i32>} : memref<512x128xf32, #tpu.memory_space<vmem>>, vector<512x128xf32>,
    %c0_11 = arith.constant 0 : index
    %c0_12 = arith.constant 0 : index
    %36 = vector.load %arg5[%c0_11, %c0_12] : memref<512x1xf32, #tpu.memory_space<vmem>>, vector<512x1xf32>
    tpu.vector_store %arg5[%c0_11, %c0_12], %29 {strides = array<i32>} : memref<512x1xf32, #tpu.memory_space<vmem>>, vector<512x1xf32>,
    return
  }
  func.func @transform_0(%arg0: i32) -> i32 {
    %c0_i32 = arith.constant 0 : i32
    %c0_i32_0 = arith.constant 0 : i32
    return %c0_i32 : i32
  }
  func.func @transform_1(%arg0: i32) -> (i32, i32) {
    %c0_i32 = arith.constant 0 : i32
    %c0_i32_0 = arith.constant 0 : i32
    %c0_i32_1 = arith.constant 0 : i32
    return %c0_i32, %c0_i32_0 : i32, i32
  }
  func.func @transform_2(%arg0: i32) -> (i32, i32) {
    %c0_i32 = arith.constant 0 : i32
    %c0_i32_0 = arith.constant 0 : i32
    return %arg0, %c0_i32 : i32, i32
  }
  func.func @transform_3(%arg0: i32) -> (i32, i32) {
    %c0_i32 = arith.constant 0 : i32
    %c0_i32_0 = arith.constant 0 : i32
    return %arg0, %c0_i32 : i32, i32
  }
  func.func @transform_4(%arg0: i32) -> (i32, i32) {
    %c0_i32 = arith.constant 0 : i32
    %c0_i32_0 = arith.constant 0 : i32
    return %arg0, %c0_i32 : i32, i32
  }
}

</mosaic_0001>

<llo_original>
// kernel: tpu_custom_call.1
$region0: #{tpu_custom_call.1}
  #allocation0 [shape = 'u32[]', space=smem, size = 0x4, offset = 0x4, fixed_abs, tag = 'smem constant byte address 0x4 - core index']
  #allocation1 [shape = 'u32[144,128]{1,0:T(1,128)}', space=vmem, size = 0x12000, scoped, tag = 'internal scratch']
  %s0 = inlined_call_operand.hbm [shape: f32[2], index: 0, kind: input, shape index: {}]
  %s1 = inlined_call_operand.vmem [shape: f32[1,128], index: 1, kind: input, shape index: {}]
  %s2 = inlined_call_operand.hbm [shape: f32[1024,128], index: 2, kind: input, shape index: {}]
  %s3 = inlined_call_operand.hbm [shape: f32[1024,128], index: 3, kind: output, shape index: {0}]
  %s4 = inlined_call_operand.vmem [shape: f32[1024,1], index: 4, kind: output, shape index: {1}]
  %5 = xla_tuple %s3, %s4
  %s6 = sld [smem:[#allocation0]]
  $region61: #{tpu_custom_call.1} parent=0
    _
  %s8 = ssub.s32 1, %s6
  %s9 = scalar_select 0, %s8, %s6
  $region1: #{tpu_custom_call.1} parent=0
    #allocation2 [shape = 'u8[512]{0}', space=smem, size = 0x200, scoped, tag = 'input window, operand 0, single buffered']
    #allocation3 [shape = 's32[2]{0}', space=sflag, size = 0x8, scoped, tag = 'scoped memory for tpu_custom_call.1']
    #allocation4 [shape = 's32[2]{0}', space=sflag, size = 0x8, scoped, tag = 'scoped memory for tpu_custom_call.1']
    #allocation5 [shape = 's32[2]{0}', space=sflag, size = 0x8, scoped, tag = 'scoped memory for tpu_custom_call.1']
    #allocation6 [shape = 'u8[524288]{0}', space=vmem, size = 0x80000, scoped, tag = 'input window, operand 2']
    #allocation7 [shape = 'u8[524288]{0}', space=vmem, size = 0x80000, scoped, tag = 'output window, operand 0']
    %10 = vsyncpa [#allocation5], 0
    %11 = vsyncpa [#allocation3], 0
    %s12 = scalar_lea.sflag [#allocation3], 1
    %13 = vsyncpa %s12, 0
    %14 = vsyncpa [#allocation4], 0
    %s15 = scalar_lea.sflag [#allocation4], 1
    %16 = vsyncpa %s15, 0
    loop: start=0, step=1, limit=4
    $region2: #{tpu_custom_call.1} parent=1 // loop_pre_header
      _
    $region3: #{tpu_custom_call.1} parent=1 // loop_header
      %s18 = sphi 0, %s22
      %p19 = scmp.ge.s32.totalorder %s18, 4
      %s26 = sphi 0, %s26
      %s28 = sphi 0, %s26
      %s29 = sphi 0, %s28
      %s43 = sphi 0, %s29
      %s47 = sphi 0, %s47
      %s49 = sphi 0, %s47
      %s50 = sphi 0, %s49
      %s64 = sphi 0, %s50
      %s70 = sphi 0, %s72
      %s73 = sphi 0, %s70
      %s74 = sphi 0, %s73
      %s90 = sphi 0, %s74
      %s96 = sphi 0, %s98
      %s99 = sphi 0, %s96
      %s100 = sphi 0, %s99
      %s116 = sphi 0, %s100
      %s122 = sphi 0, %s124
      %s125 = sphi 0, %s122
      %s126 = sphi 0, %s125
      %s142 = sphi 0, %s126
    $region4: #{tpu_custom_call.1} parent=1 // loop_header_branch
      %21 = sbr.rel (%p19) target = $region8
    $region5: #{tpu_custom_call.1} parent=1 // loop_body
      %s23 = ssub.s32 %s18, 1
      %s24 = ssub.s32 %s18, 2
      %s25 = sadd.s32 %s18, 1
      %s27 = sadd.s32 %s26, 1
      %p30 = scmp.eq.s32.totalorder %s18, 1
      %p31 = scmp.ne.s32.totalorder %s26, %s28
      %p32 = scmp.eq.s32.totalorder %s18, 0
      %p33 = por %p31, %p32
      %p34 = scmp.ne.s32.totalorder %s26, %s28
      %p35 = scmp.eq.s32.totalorder %s23, 1
      %p36 = por %p34, %p35
      %p37 = scmp.ne.s32.totalorder %s28, %s29
      %p38 = scmp.eq.s32.totalorder %s23, 0
      %p39 = por %p37, %p38
      %p40 = scmp.ne.s32.totalorder %s28, %s29
      %p41 = scmp.eq.s32.totalorder %s24, 1
      %p42 = por %p40, %p41
      %p44 = scmp.ne.s32.totalorder %s29, %s43
      %p45 = scmp.eq.s32.totalorder %s24, 0
      %p46 = por %p44, %p45
      %s48 = sadd.s32 %s47, 1
      %p51 = scmp.eq.s32.totalorder %s18, 1
      %p52 = scmp.ne.s32.totalorder %s47, %s49
      %p53 = scmp.eq.s32.totalorder %s18, 0
      %p54 = por %p52, %p53
      %p55 = scmp.ne.s32.totalorder %s47, %s49
      %p56 = scmp.eq.s32.totalorder %s23, 1
      %p57 = por %p55, %p56
      %p58 = scmp.ne.s32.totalorder %s49, %s50
      %p59 = scmp.eq.s32.totalorder %s23, 0
      %p60 = por %p58, %p59
      %p61 = scmp.ne.s32.totalorder %s49, %s50
      %p62 = scmp.eq.s32.totalorder %s24, 1
      %p63 = por %p61, %p62
      %p65 = scmp.ne.s32.totalorder %s50, %s64
      %p66 = scmp.eq.s32.totalorder %s24, 0
      %p67 = por %p65, %p66
      %s68 = ssub.s32 %s18, %s25
      %p69 = scmp.eq.s32.totalorder %s68, 0
      %s71 = sadd.s32 %s70, 1
      %s72 = scalar_select %p69, %s70, %s71
      %p75 = pneg %p69
      %p76 = scmp.eq.s32.totalorder %s18, 1
      %p77 = por %p75, %p76
      %p78 = scmp.ne.s32.totalorder %s70, %s73
      %p79 = scmp.eq.s32.totalorder %s18, 0
      %p80 = por %p78, %p79
      %p81 = scmp.ne.s32.totalorder %s70, %s73
      %p82 = scmp.eq.s32.totalorder %s23, 1
      %p83 = por %p81, %p82
      %p84 = scmp.ne.s32.totalorder %s73, %s74
      %p85 = scmp.eq.s32.totalorder %s23, 0
      %p86 = por %p84, %p85
      %p87 = scmp.ne.s32.totalorder %s73, %s74
      %p88 = scmp.eq.s32.totalorder %s24, 1
      %p89 = por %p87, %p88
      %p91 = scmp.ne.s32.totalorder %s74, %s90
      %p92 = scmp.eq.s32.totalorder %s24, 0
      %p93 = por %p91, %p92
      %s94 = ssub.s32 %s18, %s25
      %p95 = scmp.eq.s32.totalorder %s94, 0
      %s97 = sadd.s32 %s96, 1
      %s98 = scalar_select %p95, %s96, %s97
      %p101 = pneg %p95
      %p102 = scmp.eq.s32.totalorder %s18, 1
      %p103 = por %p101, %p102
      %p104 = scmp.ne.s32.totalorder %s96, %s99
      %p105 = scmp.eq.s32.totalorder %s18, 0
      %p106 = por %p104, %p105
      %p107 = scmp.ne.s32.totalorder %s96, %s99
      %p108 = scmp.eq.s32.totalorder %s23, 1
      %p109 = por %p107, %p108
      %p110 = scmp.ne.s32.totalorder %s99, %s100
      %p111 = scmp.eq.s32.totalorder %s23, 0
      %p112 = por %p110, %p111
      %p113 = scmp.ne.s32.totalorder %s99, %s100
      %p114 = scmp.eq.s32.totalorder %s24, 1
      %p115 = por %p113, %p114
      %p117 = scmp.ne.s32.totalorder %s100, %s116
      %p118 = scmp.eq.s32.totalorder %s24, 0
      %p119 = por %p117, %p118
      %s120 = ssub.s32 %s18, %s25
      %p121 = scmp.eq.s32.totalorder %s120, 0
      %s123 = sadd.s32 %s122, 1
      %s124 = scalar_select %p121, %s122, %s123
      %p127 = pneg %p121
      %p128 = scmp.eq.s32.totalorder %s18, 1
      %p129 = por %p127, %p128
      %p130 = scmp.ne.s32.totalorder %s122, %s125
      %p131 = scmp.eq.s32.totalorder %s18, 0
      %p132 = por %p130, %p131
      %p133 = scmp.ne.s32.totalorder %s122, %s125
      %p134 = scmp.eq.s32.totalorder %s23, 1
      %p135 = por %p133, %p134
      %p136 = scmp.ne.s32.totalorder %s125, %s126
      %p137 = scmp.eq.s32.totalorder %s23, 0
      %p138 = por %p136, %p137
      %p139 = scmp.ne.s32.totalorder %s125, %s126
      %p140 = scmp.eq.s32.totalorder %s24, 1
      %p141 = por %p139, %p140
      %p143 = scmp.ne.s32.totalorder %s126, %s142
      %p144 = scmp.eq.s32.totalorder %s24, 0
      %p145 = por %p143, %p144
      %p146 = scmp.le.s32.totalorder 1, %s18
      %p147 = scmp.lt.s32.totalorder %s18, 3
      %p148 = pnand %p146, %p147
      %p149 = pneg %p148
      // Predicated region
      $region9: #{tpu_custom_call.1} parent=5 // pred_check
        _
      $region10: #{tpu_custom_call.1} parent=5 // pred_check_branch
        %151 = sbr.rel (%p148) target = $region12
      $region11: #{tpu_custom_call.1} parent=5 // pred_region
        %s152 = ssub.s32 %s18, 1
        // Predicated region
        $region13: #{tpu_custom_call.1} parent=11 // pred_check
          %p153 = pneg %p39
        $region14: #{tpu_custom_call.1} parent=11 // pred_check_branch
          %155 = sbr.rel (%p153) target = $region16
        $region15: #{tpu_custom_call.1} parent=11 // pred_region
          %s157 = ssub.s32 16, 16
          %158 = vsyncadd [#allocation5], %s157
          %161 = dma.hbm_to_smem %s0, 16, [#allocation2], [#allocation5]
        $region16: #{tpu_custom_call.1} parent=11 // pred_fallthru
          _
        // Predicated region
        $region17: #{tpu_custom_call.1} parent=11 // pred_check
          %p162 = pneg %p60
        $region18: #{tpu_custom_call.1} parent=11 // pred_check_branch
          %164 = sbr.rel (%p162) target = $region20
        $region19: #{tpu_custom_call.1} parent=11 // pred_region
          _
        $region20: #{tpu_custom_call.1} parent=11 // pred_fallthru
          _
      $region12: #{tpu_custom_call.1} parent=5 // pred_fallthru
        _
      %p165 = scmp.lt.s32.totalorder %s18, 2
      // Predicated region
      $region21: #{tpu_custom_call.1} parent=5 // pred_check
        %p166 = pneg %p165
      $region22: #{tpu_custom_call.1} parent=5 // pred_check_branch
        %168 = sbr.rel (%p166) target = $region24
      $region23: #{tpu_custom_call.1} parent=5 // pred_region
        // Predicated region
        $region25: #{tpu_custom_call.1} parent=23 // pred_check
          %p169 = pneg %p80
        $region26: #{tpu_custom_call.1} parent=23 // pred_check_branch
          %171 = sbr.rel (%p169) target = $region28
        $region27: #{tpu_custom_call.1} parent=23 // pred_region
          %s172 = sand.u32 %s70, 1
          %s173 = scalar_lea.sflag [#allocation3], %s172
          %s174 = sand.u32 %s70, 1
          %s175 = smul.addr %s174, 512
          %s176 = scalar_lea.vmem [#allocation6], %s175
          %s177 = smul.u32 64, %s18
          %s179 = ssub.s32 8192, 8192
          %180 = vsyncadd %s173, %s179
          %s181 = smul.addr %s177, 128
          %s182 = scalar_lea.hbm %s2, %s181
          %s183 = sshll.u32 %s176, 4
          %s184 = int_to_ptr.vmem [resolvable:$true] %s183
          %189 = dma.hbm_to_vmem [thread:$0]  %s182, 8192, %s184, %s173, 128, 128, 8
        $region28: #{tpu_custom_call.1} parent=23 // pred_fallthru
          _
      $region24: #{tpu_custom_call.1} parent=5 // pred_fallthru
        _
      %p190 = scmp.le.s32.totalorder 1, %s18
      %p191 = scmp.lt.s32.totalorder %s18, 3
      %p192 = pnand %p190, %p191
      %p193 = pneg %p192
      // Predicated region
      $region29: #{tpu_custom_call.1} parent=5 // pred_check
        _
      $region30: #{tpu_custom_call.1} parent=5 // pred_check_branch
        %195 = sbr.rel (%p192) target = $region32
      $region31: #{tpu_custom_call.1} parent=5 // pred_region
        %s196 = ssub.s32 %s18, 1
        // Predicated region
        $region33: #{tpu_custom_call.1} parent=31 // pred_check
          %p197 = pneg %p39
        $region34: #{tpu_custom_call.1} parent=31 // pred_check_branch
          %199 = sbr.rel (%p197) target = $region36
        $region35: #{tpu_custom_call.1} parent=31 // pred_region
          %200 = dma.done [#allocation5], 16
        $region36: #{tpu_custom_call.1} parent=31 // pred_fallthru
          _
        %s201 = sand.u32 %s73, 1
        %s202 = scalar_lea.sflag [#allocation3], %s201
        %s203 = sand.u32 %s73, 1
        %s204 = smul.addr %s203, 512
        %s205 = scalar_lea.vmem [#allocation6], %s204
        // Predicated region
        $region37: #{tpu_custom_call.1} parent=31 // pred_check
          %p206 = pneg %p86
        $region38: #{tpu_custom_call.1} parent=31 // pred_check_branch
          %208 = sbr.rel (%p206) target = $region40
        $region39: #{tpu_custom_call.1} parent=31 // pred_region
          %209 = dma.done %s202, 8192
        $region40: #{tpu_custom_call.1} parent=31 // pred_fallthru
          _
        %210 = sfence
        %p211 = pneg %p39
        %p212 = pneg %p36
        %p213 = pneg %p60
        %p214 = pneg %p57
        %s215 = sand.u32 %s73, 1
        %s216 = scalar_lea.sflag [#allocation3], %s215
        %s217 = sand.u32 %s73, 1
        %s218 = smul.addr %s217, 512
        %s219 = scalar_lea.vmem [#allocation6], %s218
        %p220 = pneg %p86
        %p221 = pneg %p83
        %p222 = pneg %p112
        %p223 = pneg %p109
        %s224 = sand.u32 %s99, 1
        %s225 = scalar_lea.sflag [#allocation4], %s224
        %s226 = sand.u32 %s99, 1
        %s227 = smul.addr %s226, 512
        %s228 = scalar_lea.vmem [#allocation7], %s227
        %p229 = pneg %p138
        %p230 = pneg %p135
        %s231 = smul.u32 64, %s23
        %p232 = scmp.lt.s32.totalorder %s231, 127
        %s233 = scalar_select %p232, %s231, 127
        %s234 = smul.addr %s233, 8
        %s235 = scalar_lea.vmem %s4, %s234
        %s236 = smul.u32 64, %s23
        %s237 = smul.u32 64, %s23
        %s238 = smul.u32 64, %s23
        %p239 = scmp.lt.s32.totalorder %s238, 127
        %s240 = scalar_select %p239, %s238, 127
        %s241 = smul.addr %s240, 8
        %s242 = scalar_lea.vmem %s4, %s241
        %s243 = smul.u32 64, %s23
        %s244 = sld [smem:[#allocation2]]
        %s245 = sld [smem:[#allocation2 + $0x1]]
        %v246 = vld [vmem:[%s205] sm:$0xff]
        %v247 = vld [vmem:[%s205 + $0x8] sm:$0xff]
        %v248 = vld [vmem:[%s205 + $0x10] sm:$0xff]
        %v249 = vld [vmem:[%s205 + $0x18] sm:$0xff]
        %v250 = vld [vmem:[%s205 + $0x20] sm:$0xff]
        %v251 = vld [vmem:[%s205 + $0x28] sm:$0xff]
        %v252 = vld [vmem:[%s205 + $0x30] sm:$0xff]
        %v253 = vld [vmem:[%s205 + $0x38] sm:$0xff]
        %v254 = vld [vmem:[%s205 + $0x40] sm:$0xff]
        %v255 = vld [vmem:[%s205 + $0x48] sm:$0xff]
        %v256 = vld [vmem:[%s205 + $0x50] sm:$0xff]
        %v257 = vld [vmem:[%s205 + $0x58] sm:$0xff]
        %v258 = vld [vmem:[%s205 + $0x60] sm:$0xff]
        %v259 = vld [vmem:[%s205 + $0x68] sm:$0xff]
        %v260 = vld [vmem:[%s205 + $0x70] sm:$0xff]
        %v261 = vld [vmem:[%s205 + $0x78] sm:$0xff]
        %v262 = vld [vmem:[%s205 + $0x80] sm:$0xff]
        %v263 = vld [vmem:[%s205 + $0x88] sm:$0xff]
        %v264 = vld [vmem:[%s205 + $0x90] sm:$0xff]
        %v265 = vld [vmem:[%s205 + $0x98] sm:$0xff]
        %v266 = vld [vmem:[%s205 + $0xa0] sm:$0xff]
        %v267 = vld [vmem:[%s205 + $0xa8] sm:$0xff]
        %v268 = vld [vmem:[%s205 + $0xb0] sm:$0xff]
        %v269 = vld [vmem:[%s205 + $0xb8] sm:$0xff]
        %v270 = vld [vmem:[%s205 + $0xc0] sm:$0xff]
        %v271 = vld [vmem:[%s205 + $0xc8] sm:$0xff]
        %v272 = vld [vmem:[%s205 + $0xd0] sm:$0xff]
        %v273 = vld [vmem:[%s205 + $0xd8] sm:$0xff]
        %v274 = vld [vmem:[%s205 + $0xe0] sm:$0xff]
        %v275 = vld [vmem:[%s205 + $0xe8] sm:$0xff]
        %v276 = vld [vmem:[%s205 + $0xf0] sm:$0xff]
        %v277 = vld [vmem:[%s205 + $0xf8] sm:$0xff]
        %v278 = vld [vmem:[%s205 + $0x100] sm:$0xff]
        %v279 = vld [vmem:[%s205 + $0x108] sm:$0xff]
        %v280 = vld [vmem:[%s205 + $0x110] sm:$0xff]
        %v281 = vld [vmem:[%s205 + $0x118] sm:$0xff]
        %v282 = vld [vmem:[%s205 + $0x120] sm:$0xff]
        %v283 = vld [vmem:[%s205 + $0x128] sm:$0xff]
        %v284 = vld [vmem:[%s205 + $0x130] sm:$0xff]
        %v285 = vld [vmem:[%s205 + $0x138] sm:$0xff]
        %v286 = vld [vmem:[%s205 + $0x140] sm:$0xff]
        %v287 = vld [vmem:[%s205 + $0x148] sm:$0xff]
        %v288 = vld [vmem:[%s205 + $0x150] sm:$0xff]
        %v289 = vld [vmem:[%s205 + $0x158] sm:$0xff]
        %v290 = vld [vmem:[%s205 + $0x160] sm:$0xff]
        %v291 = vld [vmem:[%s205 + $0x168] sm:$0xff]
        %v292 = vld [vmem:[%s205 + $0x170] sm:$0xff]
        %v293 = vld [vmem:[%s205 + $0x178] sm:$0xff]
        %v294 = vld [vmem:[%s205 + $0x180] sm:$0xff]
        %v295 = vld [vmem:[%s205 + $0x188] sm:$0xff]
        %v296 = vld [vmem:[%s205 + $0x190] sm:$0xff]
        %v297 = vld [vmem:[%s205 + $0x198] sm:$0xff]
        %v298 = vld [vmem:[%s205 + $0x1a0] sm:$0xff]
        %v299 = vld [vmem:[%s205 + $0x1a8] sm:$0xff]
        %v300 = vld [vmem:[%s205 + $0x1b0] sm:$0xff]
        %v301 = vld [vmem:[%s205 + $0x1b8] sm:$0xff]
        %v302 = vld [vmem:[%s205 + $0x1c0] sm:$0xff]
        %v303 = vld [vmem:[%s205 + $0x1c8] sm:$0xff]
        %v304 = vld [vmem:[%s205 + $0x1d0] sm:$0xff]
        %v305 = vld [vmem:[%s205 + $0x1d8] sm:$0xff]
        %v306 = vld [vmem:[%s205 + $0x1e0] sm:$0xff]
        %v307 = vld [vmem:[%s205 + $0x1e8] sm:$0xff]
        %v308 = vld [vmem:[%s205 + $0x1f0] sm:$0xff]
        %v309 = vld [vmem:[%s205 + $0x1f8] sm:$0xff]
        %v310 = vld [vmem:[%s1] sm:$0x1]
        %v312 = vlaneseq
        %v313 = vshrl.u32 %v312, 7
        %v314 = vsub.s32 0, %v313
        %v315 = vrot.slane %v310, %v314
        %v317 = vsub.f32 %v246, %v315
        %v318 = vsub.f32 %v247, %v315
        %v319 = vsub.f32 %v248, %v315
        %v320 = vsub.f32 %v249, %v315
        %v321 = vsub.f32 %v250, %v315
        %v322 = vsub.f32 %v251, %v315
        %v323 = vsub.f32 %v252, %v315
        %v324 = vsub.f32 %v253, %v315
        %v325 = vsub.f32 %v254, %v315
        %v326 = vsub.f32 %v255, %v315
        %v327 = vsub.f32 %v256, %v315
        %v328 = vsub.f32 %v257, %v315
        %v329 = vsub.f32 %v258, %v315
        %v330 = vsub.f32 %v259, %v315
        %v331 = vsub.f32 %v260, %v315
        %v332 = vsub.f32 %v261, %v315
        %v333 = vsub.f32 %v262, %v315
        %v334 = vsub.f32 %v263, %v315
        %v335 = vsub.f32 %v264, %v315
        %v336 = vsub.f32 %v265, %v315
        %v337 = vsub.f32 %v266, %v315
        %v338 = vsub.f32 %v267, %v315
        %v339 = vsub.f32 %v268, %v315
        %v340 = vsub.f32 %v269, %v315
        %v341 = vsub.f32 %v270, %v315
        %v342 = vsub.f32 %v271, %v315
        %v343 = vsub.f32 %v272, %v315
        %v344 = vsub.f32 %v273, %v315
        %v345 = vsub.f32 %v274, %v315
        %v346 = vsub.f32 %v275, %v315
        %v347 = vsub.f32 %v276, %v315
        %v348 = vsub.f32 %v277, %v315
        %v349 = vsub.f32 %v278, %v315
        %v350 = vsub.f32 %v279, %v315
        %v351 = vsub.f32 %v280, %v315
        %v352 = vsub.f32 %v281, %v315
        %v353 = vsub.f32 %v282, %v315
        %v354 = vsub.f32 %v283, %v315
        %v355 = vsub.f32 %v284, %v315
        %v356 = vsub.f32 %v285, %v315
        %v357 = vsub.f32 %v286, %v315
        %v358 = vsub.f32 %v287, %v315
        %v359 = vsub.f32 %v288, %v315
        %v360 = vsub.f32 %v289, %v315
        %v361 = vsub.f32 %v290, %v315
        %v362 = vsub.f32 %v291, %v315
        %v363 = vsub.f32 %v292, %v315
        %v364 = vsub.f32 %v293, %v315
        %v365 = vsub.f32 %v294, %v315
        %v366 = vsub.f32 %v295, %v315
        %v367 = vsub.f32 %v296, %v315
        %v368 = vsub.f32 %v297, %v315
        %v369 = vsub.f32 %v298, %v315
        %v370 = vsub.f32 %v299, %v315
        %v371 = vsub.f32 %v300, %v315
        %v372 = vsub.f32 %v301, %v315
        %v373 = vsub.f32 %v302, %v315
        %v374 = vsub.f32 %v303, %v315
        %v375 = vsub.f32 %v304, %v315
        %v376 = vsub.f32 %v305, %v315
        %v377 = vsub.f32 %v306, %v315
        %v378 = vsub.f32 %v307, %v315
        %v379 = vsub.f32 %v308, %v315
        %v380 = vsub.f32 %v309, %v315
        %v381 = vmul.f32 %v317, %v317
        %v382 = vmul.f32 %v318, %v318
        %v383 = vmul.f32 %v319, %v319
        %v384 = vmul.f32 %v320, %v320
        %v385 = vmul.f32 %v321, %v321
        %v386 = vmul.f32 %v322, %v322
        %v387 = vmul.f32 %v323, %v323
        %v388 = vmul.f32 %v324, %v324
        %v389 = vmul.f32 %v325, %v325
        %v390 = vmul.f32 %v326, %v326
        %v391 = vmul.f32 %v327, %v327
        %v392 = vmul.f32 %v328, %v328
        %v393 = vmul.f32 %v329, %v329
        %v394 = vmul.f32 %v330, %v330
        %v395 = vmul.f32 %v331, %v331
        %v396 = vmul.f32 %v332, %v332
        %v397 = vmul.f32 %v333, %v333
        %v398 = vmul.f32 %v334, %v334
        %v399 = vmul.f32 %v335, %v335
        %v400 = vmul.f32 %v336, %v336
        %v401 = vmul.f32 %v337, %v337
        %v402 = vmul.f32 %v338, %v338
        %v403 = vmul.f32 %v339, %v339
        %v404 = vmul.f32 %v340, %v340
        %v405 = vmul.f32 %v341, %v341
        %v406 = vmul.f32 %v342, %v342
        %v407 = vmul.f32 %v343, %v343
        %v408 = vmul.f32 %v344, %v344
        %v409 = vmul.f32 %v345, %v345
        %v410 = vmul.f32 %v346, %v346
        %v411 = vmul.f32 %v347, %v347
        %v412 = vmul.f32 %v348, %v348
        %v413 = vmul.f32 %v349, %v349
        %v414 = vmul.f32 %v350, %v350
        %v415 = vmul.f32 %v351, %v351
        %v416 = vmul.f32 %v352, %v352
        %v417 = vmul.f32 %v353, %v353
        %v418 = vmul.f32 %v354, %v354
        %v419 = vmul.f32 %v355, %v355
        %v420 = vmul.f32 %v356, %v356
        %v421 = vmul.f32 %v357, %v357
        %v422 = vmul.f32 %v358, %v358
        %v423 = vmul.f32 %v359, %v359
        %v424 = vmul.f32 %v360, %v360
        %v425 = vmul.f32 %v361, %v361
        %v426 = vmul.f32 %v362, %v362
        %v427 = vmul.f32 %v363, %v363
        %v428 = vmul.f32 %v364, %v364
        %v429 = vmul.f32 %v365, %v365
        %v430 = vmul.f32 %v366, %v366
        %v431 = vmul.f32 %v367, %v367
        %v432 = vmul.f32 %v368, %v368
        %v433 = vmul.f32 %v369, %v369
        %v434 = vmul.f32 %v370, %v370
        %v435 = vmul.f32 %v371, %v371
        %v436 = vmul.f32 %v372, %v372
        %v437 = vmul.f32 %v373, %v373
        %v438 = vmul.f32 %v374, %v374
        %v439 = vmul.f32 %v375, %v375
        %v440 = vmul.f32 %v376, %v376
        %v441 = vmul.f32 %v377, %v377
        %v442 = vmul.f32 %v378, %v378
        %v443 = vmul.f32 %v379, %v379
        %v444 = vmul.f32 %v380, %v380
        %445 = vadd.xlane.f32.xlu0 %v381
        %v446 = vpop.xlane.xlu0 %445
        %447 = vadd.xlane.f32.xlu0 %v382
        %v448 = vpop.xlane.xlu0 %447
        %449 = vadd.xlane.f32.xlu0 %v383
        %v450 = vpop.xlane.xlu0 %449
        %451 = vadd.xlane.f32.xlu0 %v384
        %v452 = vpop.xlane.xlu0 %451
        %453 = vadd.xlane.f32.xlu0 %v385
        %v454 = vpop.xlane.xlu0 %453
        %455 = vadd.xlane.f32.xlu0 %v386
        %v456 = vpop.xlane.xlu0 %455
        %457 = vadd.xlane.f32.xlu0 %v387
        %v458 = vpop.xlane.xlu0 %457
        %459 = vadd.xlane.f32.xlu0 %v388
        %v460 = vpop.xlane.xlu0 %459
        %461 = vadd.xlane.f32.xlu0 %v389
        %v462 = vpop.xlane.xlu0 %461
        %463 = vadd.xlane.f32.xlu0 %v390
        %v464 = vpop.xlane.xlu0 %463
        %465 = vadd.xlane.f32.xlu0 %v391
        %v466 = vpop.xlane.xlu0 %465
        %467 = vadd.xlane.f32.xlu0 %v392
        %v468 = vpop.xlane.xlu0 %467
        %469 = vadd.xlane.f32.xlu0 %v393
        %v470 = vpop.xlane.xlu0 %469
        %471 = vadd.xlane.f32.xlu0 %v394
        %v472 = vpop.xlane.xlu0 %471
        %473 = vadd.xlane.f32.xlu0 %v395
        %v474 = vpop.xlane.xlu0 %473
        %475 = vadd.xlane.f32.xlu0 %v396
        %v476 = vpop.xlane.xlu0 %475
        %477 = vadd.xlane.f32.xlu0 %v397
        %v478 = vpop.xlane.xlu0 %477
        %479 = vadd.xlane.f32.xlu0 %v398
        %v480 = vpop.xlane.xlu0 %479
        %481 = vadd.xlane.f32.xlu0 %v399
        %v482 = vpop.xlane.xlu0 %481
        %483 = vadd.xlane.f32.xlu0 %v400
        %v484 = vpop.xlane.xlu0 %483
        %485 = vadd.xlane.f32.xlu0 %v401
        %v486 = vpop.xlane.xlu0 %485
        %487 = vadd.xlane.f32.xlu0 %v402
        %v488 = vpop.xlane.xlu0 %487
        %489 = vadd.xlane.f32.xlu0 %v403
        %v490 = vpop.xlane.xlu0 %489
        %491 = vadd.xlane.f32.xlu0 %v404
        %v492 = vpop.xlane.xlu0 %491
        %493 = vadd.xlane.f32.xlu0 %v405
        %v494 = vpop.xlane.xlu0 %493
        %495 = vadd.xlane.f32.xlu0 %v406
        %v496 = vpop.xlane.xlu0 %495
        %497 = vadd.xlane.f32.xlu0 %v407
        %v498 = vpop.xlane.xlu0 %497
        %499 = vadd.xlane.f32.xlu0 %v408
        %v500 = vpop.xlane.xlu0 %499
        %501 = vadd.xlane.f32.xlu0 %v409
        %v502 = vpop.xlane.xlu0 %501
        %503 = vadd.xlane.f32.xlu0 %v410
        %v504 = vpop.xlane.xlu0 %503
        %505 = vadd.xlane.f32.xlu0 %v411
        %v506 = vpop.xlane.xlu0 %505
        %507 = vadd.xlane.f32.xlu0 %v412
        %v508 = vpop.xlane.xlu0 %507
        %509 = vadd.xlane.f32.xlu0 %v413
        %v510 = vpop.xlane.xlu0 %509
        %511 = vadd.xlane.f32.xlu0 %v414
        %v512 = vpop.xlane.xlu0 %511
        %513 = vadd.xlane.f32.xlu0 %v415
        %v514 = vpop.xlane.xlu0 %513
        %515 = vadd.xlane.f32.xlu0 %v416
        %v516 = vpop.xlane.xlu0 %515
        %517 = vadd.xlane.f32.xlu0 %v417
        %v518 = vpop.xlane.xlu0 %517
        %519 = vadd.xlane.f32.xlu0 %v418
        %v520 = vpop.xlane.xlu0 %519
        %521 = vadd.xlane.f32.xlu0 %v419
        %v522 = vpop.xlane.xlu0 %521
        %523 = vadd.xlane.f32.xlu0 %v420
        %v524 = vpop.xlane.xlu0 %523
        %525 = vadd.xlane.f32.xlu0 %v421
        %v526 = vpop.xlane.xlu0 %525
        %527 = vadd.xlane.f32.xlu0 %v422
        %v528 = vpop.xlane.xlu0 %527
        %529 = vadd.xlane.f32.xlu0 %v423
        %v530 = vpop.xlane.xlu0 %529
        %531 = vadd.xlane.f32.xlu0 %v424
        %v532 = vpop.xlane.xlu0 %531
        %533 = vadd.xlane.f32.xlu0 %v425
        %v534 = vpop.xlane.xlu0 %533
        %535 = vadd.xlane.f32.xlu0 %v426
        %v536 = vpop.xlane.xlu0 %535
        %537 = vadd.xlane.f32.xlu0 %v427
        %v538 = vpop.xlane.xlu0 %537
        %539 = vadd.xlane.f32.xlu0 %v428
        %v540 = vpop.xlane.xlu0 %539
        %541 = vadd.xlane.f32.xlu0 %v429
        %v542 = vpop.xlane.xlu0 %541
        %543 = vadd.xlane.f32.xlu0 %v430
        %v544 = vpop.xlane.xlu0 %543
        %545 = vadd.xlane.f32.xlu0 %v431
        %v546 = vpop.xlane.xlu0 %545
        %547 = vadd.xlane.f32.xlu0 %v432
        %v548 = vpop.xlane.xlu0 %547
        %549 = vadd.xlane.f32.xlu0 %v433
        %v550 = vpop.xlane.xlu0 %549
        %551 = vadd.xlane.f32.xlu0 %v434
        %v552 = vpop.xlane.xlu0 %551
        %553 = vadd.xlane.f32.xlu0 %v435
        %v554 = vpop.xlane.xlu0 %553
        %555 = vadd.xlane.f32.xlu0 %v436
        %v556 = vpop.xlane.xlu0 %555
        %557 = vadd.xlane.f32.xlu0 %v437
        %v558 = vpop.xlane.xlu0 %557
        %559 = vadd.xlane.f32.xlu0 %v438
        %v560 = vpop.xlane.xlu0 %559
        %561 = vadd.xlane.f32.xlu0 %v439
        %v562 = vpop.xlane.xlu0 %561
        %563 = vadd.xlane.f32.xlu0 %v440
        %v564 = vpop.xlane.xlu0 %563
        %565 = vadd.xlane.f32.xlu0 %v441
        %v566 = vpop.xlane.xlu0 %565
        %567 = vadd.xlane.f32.xlu0 %v442
        %v568 = vpop.xlane.xlu0 %567
        %569 = vadd.xlane.f32.xlu0 %v443
        %v570 = vpop.xlane.xlu0 %569
        %571 = vadd.xlane.f32.xlu0 %v444
        %v572 = vpop.xlane.xlu0 %571
        %v573 = vrsqrt.pop %v446
        %v574 = vmul.f32 %v446, %v573
        %vm575 = vcmp.eq.f32.partialorder %v446, inf
        %v576 = vsel %vm575, %v446, %v574
        %vm577 = vcmp.eq.f32.partialorder %v446, 0.0
        %v578 = vand.u32 %v446, 2147483648
        %v579 = vsel %vm577, %v578, %v576
        %v580 = vrsqrt.pop %v448
        %v581 = vmul.f32 %v448, %v580
        %vm582 = vcmp.eq.f32.partialorder %v448, inf
        %v583 = vsel %vm582, %v448, %v581
        %vm584 = vcmp.eq.f32.partialorder %v448, 0.0
        %v585 = vand.u32 %v448, 2147483648
        %v586 = vsel %vm584, %v585, %v583
        %v587 = vrsqrt.pop %v450
        %v588 = vmul.f32 %v450, %v587
        %vm589 = vcmp.eq.f32.partialorder %v450, inf
        %v590 = vsel %vm589, %v450, %v588
        %vm591 = vcmp.eq.f32.partialorder %v450, 0.0
        %v592 = vand.u32 %v450, 2147483648
        %v593 = vsel %vm591, %v592, %v590
        %v594 = vrsqrt.pop %v452
        %v595 = vmul.f32 %v452, %v594
        %vm596 = vcmp.eq.f32.partialorder %v452, inf
        %v597 = vsel %vm596, %v452, %v595
        %vm598 = vcmp.eq.f32.partialorder %v452, 0.0
        %v599 = vand.u32 %v452, 2147483648
        %v600 = vsel %vm598, %v599, %v597
        %v601 = vrsqrt.pop %v454
        %v602 = vmul.f32 %v454, %v601
        %vm603 = vcmp.eq.f32.partialorder %v454, inf
        %v604 = vsel %vm603, %v454, %v602
        %vm605 = vcmp.eq.f32.partialorder %v454, 0.0
        %v606 = vand.u32 %v454, 2147483648
        %v607 = vsel %vm605, %v606, %v604
        %v608 = vrsqrt.pop %v456
        %v609 = vmul.f32 %v456, %v608
        %vm610 = vcmp.eq.f32.partialorder %v456, inf
        %v611 = vsel %vm610, %v456, %v609
        %vm612 = vcmp.eq.f32.partialorder %v456, 0.0
        %v613 = vand.u32 %v456, 2147483648
        %v614 = vsel %vm612, %v613, %v611
        %v615 = vrsqrt.pop %v458
        %v616 = vmul.f32 %v458, %v615
        %vm617 = vcmp.eq.f32.partialorder %v458, inf
        %v618 = vsel %vm617, %v458, %v616
        %vm619 = vcmp.eq.f32.partialorder %v458, 0.0
        %v620 = vand.u32 %v458, 2147483648
        %v621 = vsel %vm619, %v620, %v618
        %v622 = vrsqrt.pop %v460
        %v623 = vmul.f32 %v460, %v622
        %vm624 = vcmp.eq.f32.partialorder %v460, inf
        %v625 = vsel %vm624, %v460, %v623
        %vm626 = vcmp.eq.f32.partialorder %v460, 0.0
        %v627 = vand.u32 %v460, 2147483648
        %v628 = vsel %vm626, %v627, %v625
        %v629 = vrsqrt.pop %v462
        %v630 = vmul.f32 %v462, %v629
        %vm631 = vcmp.eq.f32.partialorder %v462, inf
        %v632 = vsel %vm631, %v462, %v630
        %vm633 = vcmp.eq.f32.partialorder %v462, 0.0
        %v634 = vand.u32 %v462, 2147483648
        %v635 = vsel %vm633, %v634, %v632
        %v636 = vrsqrt.pop %v464
        %v637 = vmul.f32 %v464, %v636
        %vm638 = vcmp.eq.f32.partialorder %v464, inf
        %v639 = vsel %vm638, %v464, %v637
        %vm640 = vcmp.eq.f32.partialorder %v464, 0.0
        %v641 = vand.u32 %v464, 2147483648
        %v642 = vsel %vm640, %v641, %v639
        %v643 = vrsqrt.pop %v466
        %v644 = vmul.f32 %v466, %v643
        %vm645 = vcmp.eq.f32.partialorder %v466, inf
        %v646 = vsel %vm645, %v466, %v644
        %vm647 = vcmp.eq.f32.partialorder %v466, 0.0
        %v648 = vand.u32 %v466, 2147483648
        %v649 = vsel %vm647, %v648, %v646
        %v650 = vrsqrt.pop %v468
        %v651 = vmul.f32 %v468, %v650
        %vm652 = vcmp.eq.f32.partialorder %v468, inf
        %v653 = vsel %vm652, %v468, %v651
        %vm654 = vcmp.eq.f32.partialorder %v468, 0.0
        %v655 = vand.u32 %v468, 2147483648
        %v656 = vsel %vm654, %v655, %v653
        %v657 = vrsqrt.pop %v470
        %v658 = vmul.f32 %v470, %v657
        %vm659 = vcmp.eq.f32.partialorder %v470, inf
        %v660 = vsel %vm659, %v470, %v658
        %vm661 = vcmp.eq.f32.partialorder %v470, 0.0
        %v662 = vand.u32 %v470, 2147483648
        %v663 = vsel %vm661, %v662, %v660
        %v664 = vrsqrt.pop %v472
        %v665 = vmul.f32 %v472, %v664
        %vm666 = vcmp.eq.f32.partialorder %v472, inf
        %v667 = vsel %vm666, %v472, %v665
        %vm668 = vcmp.eq.f32.partialorder %v472, 0.0
        %v669 = vand.u32 %v472, 2147483648
        %v670 = vsel %vm668, %v669, %v667
        %v671 = vrsqrt.pop %v474
        %v672 = vmul.f32 %v474, %v671
        %vm673 = vcmp.eq.f32.partialorder %v474, inf
        %v674 = vsel %vm673, %v474, %v672
        %vm675 = vcmp.eq.f32.partialorder %v474, 0.0
        %v676 = vand.u32 %v474, 2147483648
        %v677 = vsel %vm675, %v676, %v674
        %v678 = vrsqrt.pop %v476
        %v679 = vmul.f32 %v476, %v678
        %vm680 = vcmp.eq.f32.partialorder %v476, inf
        %v681 = vsel %vm680, %v476, %v679
        %vm682 = vcmp.eq.f32.partialorder %v476, 0.0
        %v683 = vand.u32 %v476, 2147483648
        %v684 = vsel %vm682, %v683, %v681
        %v685 = vrsqrt.pop %v478
        %v686 = vmul.f32 %v478, %v685
        %vm687 = vcmp.eq.f32.partialorder %v478, inf
        %v688 = vsel %vm687, %v478, %v686
        %vm689 = vcmp.eq.f32.partialorder %v478, 0.0
        %v690 = vand.u32 %v478, 2147483648
        %v691 = vsel %vm689, %v690, %v688
        %v692 = vrsqrt.pop %v480
        %v693 = vmul.f32 %v480, %v692
        %vm694 = vcmp.eq.f32.partialorder %v480, inf
        %v695 = vsel %vm694, %v480, %v693
        %vm696 = vcmp.eq.f32.partialorder %v480, 0.0
        %v697 = vand.u32 %v480, 2147483648
        %v698 = vsel %vm696, %v697, %v695
        %v699 = vrsqrt.pop %v482
        %v700 = vmul.f32 %v482, %v699
        %vm701 = vcmp.eq.f32.partialorder %v482, inf
        %v702 = vsel %vm701, %v482, %v700
        %vm703 = vcmp.eq.f32.partialorder %v482, 0.0
        %v704 = vand.u32 %v482, 2147483648
        %v705 = vsel %vm703, %v704, %v702
        %v706 = vrsqrt.pop %v484
        %v707 = vmul.f32 %v484, %v706
        %vm708 = vcmp.eq.f32.partialorder %v484, inf
        %v709 = vsel %vm708, %v484, %v707
        %vm710 = vcmp.eq.f32.partialorder %v484, 0.0
        %v711 = vand.u32 %v484, 2147483648
        %v712 = vsel %vm710, %v711, %v709
        %v713 = vrsqrt.pop %v486
        %v714 = vmul.f32 %v486, %v713
        %vm715 = vcmp.eq.f32.partialorder %v486, inf
        %v716 = vsel %vm715, %v486, %v714
        %vm717 = vcmp.eq.f32.partialorder %v486, 0.0
        %v718 = vand.u32 %v486, 2147483648
        %v719 = vsel %vm717, %v718, %v716
        %v720 = vrsqrt.pop %v488
        %v721 = vmul.f32 %v488, %v720
        %vm722 = vcmp.eq.f32.partialorder %v488, inf
        %v723 = vsel %vm722, %v488, %v721
        %vm724 = vcmp.eq.f32.partialorder %v488, 0.0
        %v725 = vand.u32 %v488, 2147483648
        %v726 = vsel %vm724, %v725, %v723
        %v727 = vrsqrt.pop %v490
        %v728 = vmul.f32 %v490, %v727
        %vm729 = vcmp.eq.f32.partialorder %v490, inf
        %v730 = vsel %vm729, %v490, %v728
        %vm731 = vcmp.eq.f32.partialorder %v490, 0.0
        %v732 = vand.u32 %v490, 2147483648
        %v733 = vsel %vm731, %v732, %v730
        %v734 = vrsqrt.pop %v492
        %v735 = vmul.f32 %v492, %v734
        %vm736 = vcmp.eq.f32.partialorder %v492, inf
        %v737 = vsel %vm736, %v492, %v735
        %vm738 = vcmp.eq.f32.partialorder %v492, 0.0
        %v739 = vand.u32 %v492, 2147483648
        %v740 = vsel %vm738, %v739, %v737
        %v741 = vrsqrt.pop %v494
        %v742 = vmul.f32 %v494, %v741
        %vm743 = vcmp.eq.f32.partialorder %v494, inf
        %v744 = vsel %vm743, %v494, %v742
        %vm745 = vcmp.eq.f32.partialorder %v494, 0.0
        %v746 = vand.u32 %v494, 2147483648
        %v747 = vsel %vm745, %v746, %v744
        %v748 = vrsqrt.pop %v496
        %v749 = vmul.f32 %v496, %v748
        %vm750 = vcmp.eq.f32.partialorder %v496, inf
        %v751 = vsel %vm750, %v496, %v749
        %vm752 = vcmp.eq.f32.partialorder %v496, 0.0
        %v753 = vand.u32 %v496, 2147483648
        %v754 = vsel %vm752, %v753, %v751
        %v755 = vrsqrt.pop %v498
        %v756 = vmul.f32 %v498, %v755
        %vm757 = vcmp.eq.f32.partialorder %v498, inf
        %v758 = vsel %vm757, %v498, %v756
        %vm759 = vcmp.eq.f32.partialorder %v498, 0.0
        %v760 = vand.u32 %v498, 2147483648
        %v761 = vsel %vm759, %v760, %v758
        %v762 = vrsqrt.pop %v500
        %v763 = vmul.f32 %v500, %v762
        %vm764 = vcmp.eq.f32.partialorder %v500, inf
        %v765 = vsel %vm764, %v500, %v763
        %vm766 = vcmp.eq.f32.partialorder %v500, 0.0
        %v767 = vand.u32 %v500, 2147483648
        %v768 = vsel %vm766, %v767, %v765
        %v769 = vrsqrt.pop %v502
        %v770 = vmul.f32 %v502, %v769
        %vm771 = vcmp.eq.f32.partialorder %v502, inf
        %v772 = vsel %vm771, %v502, %v770
        %vm773 = vcmp.eq.f32.partialorder %v502, 0.0
        %v774 = vand.u32 %v502, 2147483648
        %v775 = vsel %vm773, %v774, %v772
        %v776 = vrsqrt.pop %v504
        %v777 = vmul.f32 %v504, %v776
        %vm778 = vcmp.eq.f32.partialorder %v504, inf
        %v779 = vsel %vm778, %v504, %v777
        %vm780 = vcmp.eq.f32.partialorder %v504, 0.0
        %v781 = vand.u32 %v504, 2147483648
        %v782 = vsel %vm780, %v781, %v779
        %v783 = vrsqrt.pop %v506
        %v784 = vmul.f32 %v506, %v783
        %vm785 = vcmp.eq.f32.partialorder %v506, inf
        %v786 = vsel %vm785, %v506, %v784
        %vm787 = vcmp.eq.f32.partialorder %v506, 0.0
        %v788 = vand.u32 %v506, 2147483648
        %v789 = vsel %vm787, %v788, %v786
        %v790 = vrsqrt.pop %v508
        %v791 = vmul.f32 %v508, %v790
        %vm792 = vcmp.eq.f32.partialorder %v508, inf
        %v793 = vsel %vm792, %v508, %v791
        %vm794 = vcmp.eq.f32.partialorder %v508, 0.0
        %v795 = vand.u32 %v508, 2147483648
        %v796 = vsel %vm794, %v795, %v793
        %v797 = vrsqrt.pop %v510
        %v798 = vmul.f32 %v510, %v797
        %vm799 = vcmp.eq.f32.partialorder %v510, inf
        %v800 = vsel %vm799, %v510, %v798
        %vm801 = vcmp.eq.f32.partialorder %v510, 0.0
        %v802 = vand.u32 %v510, 2147483648
        %v803 = vsel %vm801, %v802, %v800
        %v804 = vrsqrt.pop %v512
        %v805 = vmul.f32 %v512, %v804
        %vm806 = vcmp.eq.f32.partialorder %v512, inf
        %v807 = vsel %vm806, %v512, %v805
        %vm808 = vcmp.eq.f32.partialorder %v512, 0.0
        %v809 = vand.u32 %v512, 2147483648
        %v810 = vsel %vm808, %v809, %v807
        %v811 = vrsqrt.pop %v514
        %v812 = vmul.f32 %v514, %v811
        %vm813 = vcmp.eq.f32.partialorder %v514, inf
        %v814 = vsel %vm813, %v514, %v812
        %vm815 = vcmp.eq.f32.partialorder %v514, 0.0
        %v816 = vand.u32 %v514, 2147483648
        %v817 = vsel %vm815, %v816, %v814
        %v818 = vrsqrt.pop %v516
        %v819 = vmul.f32 %v516, %v818
        %vm820 = vcmp.eq.f32.partialorder %v516, inf
        %v821 = vsel %vm820, %v516, %v819
        %vm822 = vcmp.eq.f32.partialorder %v516, 0.0
        %v823 = vand.u32 %v516, 2147483648
        %v824 = vsel %vm822, %v823, %v821
        %v825 = vrsqrt.pop %v518
        %v826 = vmul.f32 %v518, %v825
        %vm827 = vcmp.eq.f32.partialorder %v518, inf
        %v828 = vsel %vm827, %v518, %v826
        %vm829 = vcmp.eq.f32.partialorder %v518, 0.0
        %v830 = vand.u32 %v518, 2147483648
        %v831 = vsel %vm829, %v830, %v828
        %v832 = vrsqrt.pop %v520
        %v833 = vmul.f32 %v520, %v832
        %vm834 = vcmp.eq.f32.partialorder %v520, inf
        %v835 = vsel %vm834, %v520, %v833
        %vm836 = vcmp.eq.f32.partialorder %v520, 0.0
        %v837 = vand.u32 %v520, 2147483648
        %v838 = vsel %vm836, %v837, %v835
        %v839 = vrsqrt.pop %v522
        %v840 = vmul.f32 %v522, %v839
        %vm841 = vcmp.eq.f32.partialorder %v522, inf
        %v842 = vsel %vm841, %v522, %v840
        %vm843 = vcmp.eq.f32.partialorder %v522, 0.0
        %v844 = vand.u32 %v522, 2147483648
        %v845 = vsel %vm843, %v844, %v842
        %v846 = vrsqrt.pop %v524
        %v847 = vmul.f32 %v524, %v846
        %vm848 = vcmp.eq.f32.partialorder %v524, inf
        %v849 = vsel %vm848, %v524, %v847
        %vm850 = vcmp.eq.f32.partialorder %v524, 0.0
        %v851 = vand.u32 %v524, 2147483648
        %v852 = vsel %vm850, %v851, %v849
        %v853 = vrsqrt.pop %v526
        %v854 = vmul.f32 %v526, %v853
        %vm855 = vcmp.eq.f32.partialorder %v526, inf
        %v856 = vsel %vm855, %v526, %v854
        %vm857 = vcmp.eq.f32.partialorder %v526, 0.0
        %v858 = vand.u32 %v526, 2147483648
        %v859 = vsel %vm857, %v858, %v856
        %v860 = vrsqrt.pop %v528
        %v861 = vmul.f32 %v528, %v860
        %vm862 = vcmp.eq.f32.partialorder %v528, inf
        %v863 = vsel %vm862, %v528, %v861
        %vm864 = vcmp.eq.f32.partialorder %v528, 0.0
        %v865 = vand.u32 %v528, 2147483648
        %v866 = vsel %vm864, %v865, %v863
        %v867 = vrsqrt.pop %v530
        %v868 = vmul.f32 %v530, %v867
        %vm869 = vcmp.eq.f32.partialorder %v530, inf
        %v870 = vsel %vm869, %v530, %v868
        %vm871 = vcmp.eq.f32.partialorder %v530, 0.0
        %v872 = vand.u32 %v530, 2147483648
        %v873 = vsel %vm871, %v872, %v870
        %v874 = vrsqrt.pop %v532
        %v875 = vmul.f32 %v532, %v874
        %vm876 = vcmp.eq.f32.partialorder %v532, inf
        %v877 = vsel %vm876, %v532, %v875
        %vm878 = vcmp.eq.f32.partialorder %v532, 0.0
        %v879 = vand.u32 %v532, 2147483648
        %v880 = vsel %vm878, %v879, %v877
        %v881 = vrsqrt.pop %v534
        %v882 = vmul.f32 %v534, %v881
        %vm883 = vcmp.eq.f32.partialorder %v534, inf
        %v884 = vsel %vm883, %v534, %v882
        %vm885 = vcmp.eq.f32.partialorder %v534, 0.0
        %v886 = vand.u32 %v534, 2147483648
        %v887 = vsel %vm885, %v886, %v884
        %v888 = vrsqrt.pop %v536
        %v889 = vmul.f32 %v536, %v888
        %vm890 = vcmp.eq.f32.partialorder %v536, inf
        %v891 = vsel %vm890, %v536, %v889
        %vm892 = vcmp.eq.f32.partialorder %v536, 0.0
        %v893 = vand.u32 %v536, 2147483648
        %v894 = vsel %vm892, %v893, %v891
        %v895 = vrsqrt.pop %v538
        %v896 = vmul.f32 %v538, %v895
        %vm897 = vcmp.eq.f32.partialorder %v538, inf
        %v898 = vsel %vm897, %v538, %v896
        %vm899 = vcmp.eq.f32.partialorder %v538, 0.0
        %v900 = vand.u32 %v538, 2147483648
        %v901 = vsel %vm899, %v900, %v898
        %v902 = vrsqrt.pop %v540
        %v903 = vmul.f32 %v540, %v902
        %vm904 = vcmp.eq.f32.partialorder %v540, inf
        %v905 = vsel %vm904, %v540, %v903
        %vm906 = vcmp.eq.f32.partialorder %v540, 0.0
        %v907 = vand.u32 %v540, 2147483648
        %v908 = vsel %vm906, %v907, %v905
        %v909 = vrsqrt.pop %v542
        %v910 = vmul.f32 %v542, %v909
        %vm911 = vcmp.eq.f32.partialorder %v542, inf
        %v912 = vsel %vm911, %v542, %v910
        %vm913 = vcmp.eq.f32.partialorder %v542, 0.0
        %v914 = vand.u32 %v542, 2147483648
        %v915 = vsel %vm913, %v914, %v912
        %v916 = vrsqrt.pop %v544
        %v917 = vmul.f32 %v544, %v916
        %vm918 = vcmp.eq.f32.partialorder %v544, inf
        %v919 = vsel %vm918, %v544, %v917
        %vm920 = vcmp.eq.f32.partialorder %v544, 0.0
        %v921 = vand.u32 %v544, 2147483648
        %v922 = vsel %vm920, %v921, %v919
        %v923 = vrsqrt.pop %v546
        %v924 = vmul.f32 %v546, %v923
        %vm925 = vcmp.eq.f32.partialorder %v546, inf
        %v926 = vsel %vm925, %v546, %v924
        %vm927 = vcmp.eq.f32.partialorder %v546, 0.0
        %v928 = vand.u32 %v546, 2147483648
        %v929 = vsel %vm927, %v928, %v926
        %v930 = vrsqrt.pop %v548
        %v931 = vmul.f32 %v548, %v930
        %vm932 = vcmp.eq.f32.partialorder %v548, inf
        %v933 = vsel %vm932, %v548, %v931
        %vm934 = vcmp.eq.f32.partialorder %v548, 0.0
        %v935 = vand.u32 %v548, 2147483648
        %v936 = vsel %vm934, %v935, %v933
        %v937 = vrsqrt.pop %v550
        %v938 = vmul.f32 %v550, %v937
        %vm939 = vcmp.eq.f32.partialorder %v550, inf
        %v940 = vsel %vm939, %v550, %v938
        %vm941 = vcmp.eq.f32.partialorder %v550, 0.0
        %v942 = vand.u32 %v550, 2147483648
        %v943 = vsel %vm941, %v942, %v940
        %v944 = vrsqrt.pop %v552
        %v945 = vmul.f32 %v552, %v944
        %vm946 = vcmp.eq.f32.partialorder %v552, inf
        %v947 = vsel %vm946, %v552, %v945
        %vm948 = vcmp.eq.f32.partialorder %v552, 0.0
        %v949 = vand.u32 %v552, 2147483648
        %v950 = vsel %vm948, %v949, %v947
        %v951 = vrsqrt.pop %v554
        %v952 = vmul.f32 %v554, %v951
        %vm953 = vcmp.eq.f32.partialorder %v554, inf
        %v954 = vsel %vm953, %v554, %v952
        %vm955 = vcmp.eq.f32.partialorder %v554, 0.0
        %v956 = vand.u32 %v554, 2147483648
        %v957 = vsel %vm955, %v956, %v954
        %v958 = vrsqrt.pop %v556
        %v959 = vmul.f32 %v556, %v958
        %vm960 = vcmp.eq.f32.partialorder %v556, inf
        %v961 = vsel %vm960, %v556, %v959
        %vm962 = vcmp.eq.f32.partialorder %v556, 0.0
        %v963 = vand.u32 %v556, 2147483648
        %v964 = vsel %vm962, %v963, %v961
        %v965 = vrsqrt.pop %v558
        %v966 = vmul.f32 %v558, %v965
        %vm967 = vcmp.eq.f32.partialorder %v558, inf
        %v968 = vsel %vm967, %v558, %v966
        %vm969 = vcmp.eq.f32.partialorder %v558, 0.0
        %v970 = vand.u32 %v558, 2147483648
        %v971 = vsel %vm969, %v970, %v968
        %v972 = vrsqrt.pop %v560
        %v973 = vmul.f32 %v560, %v972
        %vm974 = vcmp.eq.f32.partialorder %v560, inf
        %v975 = vsel %vm974, %v560, %v973
        %vm976 = vcmp.eq.f32.partialorder %v560, 0.0
        %v977 = vand.u32 %v560, 2147483648
        %v978 = vsel %vm976, %v977, %v975
        %v979 = vrsqrt.pop %v562
        %v980 = vmul.f32 %v562, %v979
        %vm981 = vcmp.eq.f32.partialorder %v562, inf
        %v982 = vsel %vm981, %v562, %v980
        %vm983 = vcmp.eq.f32.partialorder %v562, 0.0
        %v984 = vand.u32 %v562, 2147483648
        %v985 = vsel %vm983, %v984, %v982
        %v986 = vrsqrt.pop %v564
        %v987 = vmul.f32 %v564, %v986
        %vm988 = vcmp.eq.f32.partialorder %v564, inf
        %v989 = vsel %vm988, %v564, %v987
        %vm990 = vcmp.eq.f32.partialorder %v564, 0.0
        %v991 = vand.u32 %v564, 2147483648
        %v992 = vsel %vm990, %v991, %v989
        %v993 = vrsqrt.pop %v566
        %v994 = vmul.f32 %v566, %v993
        %vm995 = vcmp.eq.f32.partialorder %v566, inf
        %v996 = vsel %vm995, %v566, %v994
        %vm997 = vcmp.eq.f32.partialorder %v566, 0.0
        %v998 = vand.u32 %v566, 2147483648
        %v999 = vsel %vm997, %v998, %v996
        %v1000 = vrsqrt.pop %v568
        %v1001 = vmul.f32 %v568, %v1000
        %vm1002 = vcmp.eq.f32.partialorder %v568, inf
        %v1003 = vsel %vm1002, %v568, %v1001
        %vm1004 = vcmp.eq.f32.partialorder %v568, 0.0
        %v1005 = vand.u32 %v568, 2147483648
        %v1006 = vsel %vm1004, %v1005, %v1003
        %v1007 = vrsqrt.pop %v570
        %v1008 = vmul.f32 %v570, %v1007
        %vm1009 = vcmp.eq.f32.partialorder %v570, inf
        %v1010 = vsel %vm1009, %v570, %v1008
        %vm1011 = vcmp.eq.f32.partialorder %v570, 0.0
        %v1012 = vand.u32 %v570, 2147483648
        %v1013 = vsel %vm1011, %v1012, %v1010
        %v1014 = vrsqrt.pop %v572
        %v1015 = vmul.f32 %v572, %v1014
        %vm1016 = vcmp.eq.f32.partialorder %v572, inf
        %v1017 = vsel %vm1016, %v572, %v1015
        %vm1018 = vcmp.eq.f32.partialorder %v572, 0.0
        %v1019 = vand.u32 %v572, 2147483648
        %v1020 = vsel %vm1018, %v1019, %v1017
        %v1021 = vadd.f32 %v579, 1e-07
        %v1022 = vadd.f32 %v586, 1e-07
        %v1023 = vadd.f32 %v593, 1e-07
        %v1024 = vadd.f32 %v600, 1e-07
        %v1025 = vadd.f32 %v607, 1e-07
        %v1026 = vadd.f32 %v614, 1e-07
        %v1027 = vadd.f32 %v621, 1e-07
        %v1028 = vadd.f32 %v628, 1e-07
        %v1029 = vadd.f32 %v635, 1e-07
        %v1030 = vadd.f32 %v642, 1e-07
        %v1031 = vadd.f32 %v649, 1e-07
        %v1032 = vadd.f32 %v656, 1e-07
        %v1033 = vadd.f32 %v663, 1e-07
        %v1034 = vadd.f32 %v670, 1e-07
        %v1035 = vadd.f32 %v677, 1e-07
        %v1036 = vadd.f32 %v684, 1e-07
        %v1037 = vadd.f32 %v691, 1e-07
        %v1038 = vadd.f32 %v698, 1e-07
        %v1039 = vadd.f32 %v705, 1e-07
        %v1040 = vadd.f32 %v712, 1e-07
        %v1041 = vadd.f32 %v719, 1e-07
        %v1042 = vadd.f32 %v726, 1e-07
        %v1043 = vadd.f32 %v733, 1e-07
        %v1044 = vadd.f32 %v740, 1e-07
        %v1045 = vadd.f32 %v747, 1e-07
        %v1046 = vadd.f32 %v754, 1e-07
        %v1047 = vadd.f32 %v761, 1e-07
        %v1048 = vadd.f32 %v768, 1e-07
        %v1049 = vadd.f32 %v775, 1e-07
        %v1050 = vadd.f32 %v782, 1e-07
        %v1051 = vadd.f32 %v789, 1e-07
        %v1052 = vadd.f32 %v796, 1e-07
        %v1053 = vadd.f32 %v803, 1e-07
        %v1054 = vadd.f32 %v810, 1e-07
        %v1055 = vadd.f32 %v817, 1e-07
        %v1056 = vadd.f32 %v824, 1e-07
        %v1057 = vadd.f32 %v831, 1e-07
        %v1058 = vadd.f32 %v838, 1e-07
        %v1059 = vadd.f32 %v845, 1e-07
        %v1060 = vadd.f32 %v852, 1e-07
        %v1061 = vadd.f32 %v859, 1e-07
        %v1062 = vadd.f32 %v866, 1e-07
        %v1063 = vadd.f32 %v873, 1e-07
        %v1064 = vadd.f32 %v880, 1e-07
        %v1065 = vadd.f32 %v887, 1e-07
        %v1066 = vadd.f32 %v894, 1e-07
        %v1067 = vadd.f32 %v901, 1e-07
        %v1068 = vadd.f32 %v908, 1e-07
        %v1069 = vadd.f32 %v915, 1e-07
        %v1070 = vadd.f32 %v922, 1e-07
        %v1071 = vadd.f32 %v929, 1e-07
        %v1072 = vadd.f32 %v936, 1e-07
        %v1073 = vadd.f32 %v943, 1e-07
        %v1074 = vadd.f32 %v950, 1e-07
        %v1075 = vadd.f32 %v957, 1e-07
        %v1076 = vadd.f32 %v964, 1e-07
        %v1077 = vadd.f32 %v971, 1e-07
        %v1078 = vadd.f32 %v978, 1e-07
        %v1079 = vadd.f32 %v985, 1e-07
        %v1080 = vadd.f32 %v992, 1e-07
        %v1081 = vadd.f32 %v999, 1e-07
        %v1082 = vadd.f32 %v1006, 1e-07
        %v1083 = vadd.f32 %v1013, 1e-07
        %v1084 = vadd.f32 %v1020, 1e-07
        %v1085 = vstv %s244
        %v1086 = vadd.f32 %v1085, %v1021
        %v1087 = vadd.f32 %v1085, %v1022
        %v1088 = vadd.f32 %v1085, %v1023
        %v1089 = vadd.f32 %v1085, %v1024
        %v1090 = vadd.f32 %v1085, %v1025
        %v1091 = vadd.f32 %v1085, %v1026
        %v1092 = vadd.f32 %v1085, %v1027
        %v1093 = vadd.f32 %v1085, %v1028
        %v1094 = vadd.f32 %v1085, %v1029
        %v1095 = vadd.f32 %v1085, %v1030
        %v1096 = vadd.f32 %v1085, %v1031
        %v1097 = vadd.f32 %v1085, %v1032
        %v1098 = vadd.f32 %v1085, %v1033
        %v1099 = vadd.f32 %v1085, %v1034
        %v1100 = vadd.f32 %v1085, %v1035
        %v1101 = vadd.f32 %v1085, %v1036
        %v1102 = vadd.f32 %v1085, %v1037
        %v1103 = vadd.f32 %v1085, %v1038
        %v1104 = vadd.f32 %v1085, %v1039
        %v1105 = vadd.f32 %v1085, %v1040
        %v1106 = vadd.f32 %v1085, %v1041
        %v1107 = vadd.f32 %v1085, %v1042
        %v1108 = vadd.f32 %v1085, %v1043
        %v1109 = vadd.f32 %v1085, %v1044
        %v1110 = vadd.f32 %v1085, %v1045
        %v1111 = vadd.f32 %v1085, %v1046
        %v1112 = vadd.f32 %v1085, %v1047
        %v1113 = vadd.f32 %v1085, %v1048
        %v1114 = vadd.f32 %v1085, %v1049
        %v1115 = vadd.f32 %v1085, %v1050
        %v1116 = vadd.f32 %v1085, %v1051
        %v1117 = vadd.f32 %v1085, %v1052
        %v1118 = vadd.f32 %v1085, %v1053
        %v1119 = vadd.f32 %v1085, %v1054
        %v1120 = vadd.f32 %v1085, %v1055
        %v1121 = vadd.f32 %v1085, %v1056
        %v1122 = vadd.f32 %v1085, %v1057
        %v1123 = vadd.f32 %v1085, %v1058
        %v1124 = vadd.f32 %v1085, %v1059
        %v1125 = vadd.f32 %v1085, %v1060
        %v1126 = vadd.f32 %v1085, %v1061
        %v1127 = vadd.f32 %v1085, %v1062
        %v1128 = vadd.f32 %v1085, %v1063
        %v1129 = vadd.f32 %v1085, %v1064
        %v1130 = vadd.f32 %v1085, %v1065
        %v1131 = vadd.f32 %v1085, %v1066
        %v1132 = vadd.f32 %v1085, %v1067
        %v1133 = vadd.f32 %v1085, %v1068
        %v1134 = vadd.f32 %v1085, %v1069
        %v1135 = vadd.f32 %v1085, %v1070
        %v1136 = vadd.f32 %v1085, %v1071
        %v1137 = vadd.f32 %v1085, %v1072
        %v1138 = vadd.f32 %v1085, %v1073
        %v1139 = vadd.f32 %v1085, %v1074
        %v1140 = vadd.f32 %v1085, %v1075
        %v1141 = vadd.f32 %v1085, %v1076
        %v1142 = vadd.f32 %v1085, %v1077
        %v1143 = vadd.f32 %v1085, %v1078
        %v1144 = vadd.f32 %v1085, %v1079
        %v1145 = vadd.f32 %v1085, %v1080
        %v1146 = vadd.f32 %v1085, %v1081
        %v1147 = vadd.f32 %v1085, %v1082
        %v1148 = vadd.f32 %v1085, %v1083
        %v1149 = vadd.f32 %v1085, %v1084
        %v1150 = vrcp.pop %v1086
        %v1151 = vmul.f32 1.0, %v1150
        %v1152 = vrcp.pop %v1087
        %v1153 = vmul.f32 1.0, %v1152
        %v1154 = vrcp.pop %v1088
        %v1155 = vmul.f32 1.0, %v1154
        %v1156 = vrcp.pop %v1089
        %v1157 = vmul.f32 1.0, %v1156
        %v1158 = vrcp.pop %v1090
        %v1159 = vmul.f32 1.0, %v1158
        %v1160 = vrcp.pop %v1091
        %v1161 = vmul.f32 1.0, %v1160
        %v1162 = vrcp.pop %v1092
        %v1163 = vmul.f32 1.0, %v1162
        %v1164 = vrcp.pop %v1093
        %v1165 = vmul.f32 1.0, %v1164
        %v1166 = vrcp.pop %v1094
        %v1167 = vmul.f32 1.0, %v1166
        %v1168 = vrcp.pop %v1095
        %v1169 = vmul.f32 1.0, %v1168
        %v1170 = vrcp.pop %v1096
        %v1171 = vmul.f32 1.0, %v1170
        %v1172 = vrcp.pop %v1097
        %v1173 = vmul.f32 1.0, %v1172
        %v1174 = vrcp.pop %v1098
        %v1175 = vmul.f32 1.0, %v1174
        %v1176 = vrcp.pop %v1099
        %v1177 = vmul.f32 1.0, %v1176
        %v1178 = vrcp.pop %v1100
        %v1179 = vmul.f32 1.0, %v1178
        %v1180 = vrcp.pop %v1101
        %v1181 = vmul.f32 1.0, %v1180
        %v1182 = vrcp.pop %v1102
        %v1183 = vmul.f32 1.0, %v1182
        %v1184 = vrcp.pop %v1103
        %v1185 = vmul.f32 1.0, %v1184
        %v1186 = vrcp.pop %v1104
        %v1187 = vmul.f32 1.0, %v1186
        %v1188 = vrcp.pop %v1105
        %v1189 = vmul.f32 1.0, %v1188
        %v1190 = vrcp.pop %v1106
        %v1191 = vmul.f32 1.0, %v1190
        %v1192 = vrcp.pop %v1107
        %v1193 = vmul.f32 1.0, %v1192
        %v1194 = vrcp.pop %v1108
        %v1195 = vmul.f32 1.0, %v1194
        %v1196 = vrcp.pop %v1109
        %v1197 = vmul.f32 1.0, %v1196
        %v1198 = vrcp.pop %v1110
        %v1199 = vmul.f32 1.0, %v1198
        %v1200 = vrcp.pop %v1111
        %v1201 = vmul.f32 1.0, %v1200
        %v1202 = vrcp.pop %v1112
        %v1203 = vmul.f32 1.0, %v1202
        %v1204 = vrcp.pop %v1113
        %v1205 = vmul.f32 1.0, %v1204
        %v1206 = vrcp.pop %v1114
        %v1207 = vmul.f32 1.0, %v1206
        %v1208 = vrcp.pop %v1115
        %v1209 = vmul.f32 1.0, %v1208
        %v1210 = vrcp.pop %v1116
        %v1211 = vmul.f32 1.0, %v1210
        %v1212 = vrcp.pop %v1117
        %v1213 = vmul.f32 1.0, %v1212
        %v1214 = vrcp.pop %v1118
        %v1215 = vmul.f32 1.0, %v1214
        %v1216 = vrcp.pop %v1119
        %v1217 = vmul.f32 1.0, %v1216
        %v1218 = vrcp.pop %v1120
        %v1219 = vmul.f32 1.0, %v1218
        %v1220 = vrcp.pop %v1121
        %v1221 = vmul.f32 1.0, %v1220
        %v1222 = vrcp.pop %v1122
        %v1223 = vmul.f32 1.0, %v1222
        %v1224 = vrcp.pop %v1123
        %v1225 = vmul.f32 1.0, %v1224
        %v1226 = vrcp.pop %v1124
        %v1227 = vmul.f32 1.0, %v1226
        %v1228 = vrcp.pop %v1125
        %v1229 = vmul.f32 1.0, %v1228
        %v1230 = vrcp.pop %v1126
        %v1231 = vmul.f32 1.0, %v1230
        %v1232 = vrcp.pop %v1127
        %v1233 = vmul.f32 1.0, %v1232
        %v1234 = vrcp.pop %v1128
        %v1235 = vmul.f32 1.0, %v1234
        %v1236 = vrcp.pop %v1129
        %v1237 = vmul.f32 1.0, %v1236
        %v1238 = vrcp.pop %v1130
        %v1239 = vmul.f32 1.0, %v1238
        %v1240 = vrcp.pop %v1131
        %v1241 = vmul.f32 1.0, %v1240
        %v1242 = vrcp.pop %v1132
        %v1243 = vmul.f32 1.0, %v1242
        %v1244 = vrcp.pop %v1133
        %v1245 = vmul.f32 1.0, %v1244
        %v1246 = vrcp.pop %v1134
        %v1247 = vmul.f32 1.0, %v1246
        %v1248 = vrcp.pop %v1135
        %v1249 = vmul.f32 1.0, %v1248
        %v1250 = vrcp.pop %v1136
        %v1251 = vmul.f32 1.0, %v1250
        %v1252 = vrcp.pop %v1137
        %v1253 = vmul.f32 1.0, %v1252
        %v1254 = vrcp.pop %v1138
        %v1255 = vmul.f32 1.0, %v1254
        %v1256 = vrcp.pop %v1139
        %v1257 = vmul.f32 1.0, %v1256
        %v1258 = vrcp.pop %v1140
        %v1259 = vmul.f32 1.0, %v1258
        %v1260 = vrcp.pop %v1141
        %v1261 = vmul.f32 1.0, %v1260
        %v1262 = vrcp.pop %v1142
        %v1263 = vmul.f32 1.0, %v1262
        %v1264 = vrcp.pop %v1143
        %v1265 = vmul.f32 1.0, %v1264
        %v1266 = vrcp.pop %v1144
        %v1267 = vmul.f32 1.0, %v1266
        %v1268 = vrcp.pop %v1145
        %v1269 = vmul.f32 1.0, %v1268
        %v1270 = vrcp.pop %v1146
        %v1271 = vmul.f32 1.0, %v1270
        %v1272 = vrcp.pop %v1147
        %v1273 = vmul.f32 1.0, %v1272
        %v1274 = vrcp.pop %v1148
        %v1275 = vmul.f32 1.0, %v1274
        %v1276 = vrcp.pop %v1149
        %v1277 = vmul.f32 1.0, %v1276
        %v1278 = vstv %s245
        %v1279 = vmul.f32 %v1278, %v1151
        %v1280 = vmul.f32 %v1278, %v1153
        %v1281 = vmul.f32 %v1278, %v1155
        %v1282 = vmul.f32 %v1278, %v1157
        %v1283 = vmul.f32 %v1278, %v1159
        %v1284 = vmul.f32 %v1278, %v1161
        %v1285 = vmul.f32 %v1278, %v1163
        %v1286 = vmul.f32 %v1278, %v1165
        %v1287 = vmul.f32 %v1278, %v1167
        %v1288 = vmul.f32 %v1278, %v1169
        %v1289 = vmul.f32 %v1278, %v1171
        %v1290 = vmul.f32 %v1278, %v1173
        %v1291 = vmul.f32 %v1278, %v1175
        %v1292 = vmul.f32 %v1278, %v1177
        %v1293 = vmul.f32 %v1278, %v1179
        %v1294 = vmul.f32 %v1278, %v1181
        %v1295 = vmul.f32 %v1278, %v1183
        %v1296 = vmul.f32 %v1278, %v1185
        %v1297 = vmul.f32 %v1278, %v1187
        %v1298 = vmul.f32 %v1278, %v1189
        %v1299 = vmul.f32 %v1278, %v1191
        %v1300 = vmul.f32 %v1278, %v1193
        %v1301 = vmul.f32 %v1278, %v1195
        %v1302 = vmul.f32 %v1278, %v1197
        %v1303 = vmul.f32 %v1278, %v1199
        %v1304 = vmul.f32 %v1278, %v1201
        %v1305 = vmul.f32 %v1278, %v1203
        %v1306 = vmul.f32 %v1278, %v1205
        %v1307 = vmul.f32 %v1278, %v1207
        %v1308 = vmul.f32 %v1278, %v1209
        %v1309 = vmul.f32 %v1278, %v1211
        %v1310 = vmul.f32 %v1278, %v1213
        %v1311 = vmul.f32 %v1278, %v1215
        %v1312 = vmul.f32 %v1278, %v1217
        %v1313 = vmul.f32 %v1278, %v1219
        %v1314 = vmul.f32 %v1278, %v1221
        %v1315 = vmul.f32 %v1278, %v1223
        %v1316 = vmul.f32 %v1278, %v1225
        %v1317 = vmul.f32 %v1278, %v1227
        %v1318 = vmul.f32 %v1278, %v1229
        %v1319 = vmul.f32 %v1278, %v1231
        %v1320 = vmul.f32 %v1278, %v1233
        %v1321 = vmul.f32 %v1278, %v1235
        %v1322 = vmul.f32 %v1278, %v1237
        %v1323 = vmul.f32 %v1278, %v1239
        %v1324 = vmul.f32 %v1278, %v1241
        %v1325 = vmul.f32 %v1278, %v1243
        %v1326 = vmul.f32 %v1278, %v1245
        %v1327 = vmul.f32 %v1278, %v1247
        %v1328 = vmul.f32 %v1278, %v1249
        %v1329 = vmul.f32 %v1278, %v1251
        %v1330 = vmul.f32 %v1278, %v1253
        %v1331 = vmul.f32 %v1278, %v1255
        %v1332 = vmul.f32 %v1278, %v1257
        %v1333 = vmul.f32 %v1278, %v1259
        %v1334 = vmul.f32 %v1278, %v1261
        %v1335 = vmul.f32 %v1278, %v1263
        %v1336 = vmul.f32 %v1278, %v1265
        %v1337 = vmul.f32 %v1278, %v1267
        %v1338 = vmul.f32 %v1278, %v1269
        %v1339 = vmul.f32 %v1278, %v1271
        %v1340 = vmul.f32 %v1278, %v1273
        %v1341 = vmul.f32 %v1278, %v1275
        %v1342 = vmul.f32 %v1278, %v1277
        %v1343 = vadd.f32 %v1279, 1.0
        %v1344 = vadd.f32 %v1280, 1.0
        %v1345 = vadd.f32 %v1281, 1.0
        %v1346 = vadd.f32 %v1282, 1.0
        %v1347 = vadd.f32 %v1283, 1.0
        %v1348 = vadd.f32 %v1284, 1.0
        %v1349 = vadd.f32 %v1285, 1.0
        %v1350 = vadd.f32 %v1286, 1.0
        %v1351 = vadd.f32 %v1287, 1.0
        %v1352 = vadd.f32 %v1288, 1.0
        %v1353 = vadd.f32 %v1289, 1.0
        %v1354 = vadd.f32 %v1290, 1.0
        %v1355 = vadd.f32 %v1291, 1.0
        %v1356 = vadd.f32 %v1292, 1.0
        %v1357 = vadd.f32 %v1293, 1.0
        %v1358 = vadd.f32 %v1294, 1.0
        %v1359 = vadd.f32 %v1295, 1.0
        %v1360 = vadd.f32 %v1296, 1.0
        %v1361 = vadd.f32 %v1297, 1.0
        %v1362 = vadd.f32 %v1298, 1.0
        %v1363 = vadd.f32 %v1299, 1.0
        %v1364 = vadd.f32 %v1300, 1.0
        %v1365 = vadd.f32 %v1301, 1.0
        %v1366 = vadd.f32 %v1302, 1.0
        %v1367 = vadd.f32 %v1303, 1.0
        %v1368 = vadd.f32 %v1304, 1.0
        %v1369 = vadd.f32 %v1305, 1.0
        %v1370 = vadd.f32 %v1306, 1.0
        %v1371 = vadd.f32 %v1307, 1.0
        %v1372 = vadd.f32 %v1308, 1.0
        %v1373 = vadd.f32 %v1309, 1.0
        %v1374 = vadd.f32 %v1310, 1.0
        %v1375 = vadd.f32 %v1311, 1.0
        %v1376 = vadd.f32 %v1312, 1.0
        %v1377 = vadd.f32 %v1313, 1.0
        %v1378 = vadd.f32 %v1314, 1.0
        %v1379 = vadd.f32 %v1315, 1.0
        %v1380 = vadd.f32 %v1316, 1.0
        %v1381 = vadd.f32 %v1317, 1.0
        %v1382 = vadd.f32 %v1318, 1.0
        %v1383 = vadd.f32 %v1319, 1.0
        %v1384 = vadd.f32 %v1320, 1.0
        %v1385 = vadd.f32 %v1321, 1.0
        %v1386 = vadd.f32 %v1322, 1.0
        %v1387 = vadd.f32 %v1323, 1.0
        %v1388 = vadd.f32 %v1324, 1.0
        %v1389 = vadd.f32 %v1325, 1.0
        %v1390 = vadd.f32 %v1326, 1.0
        %v1391 = vadd.f32 %v1327, 1.0
        %v1392 = vadd.f32 %v1328, 1.0
        %v1393 = vadd.f32 %v1329, 1.0
        %v1394 = vadd.f32 %v1330, 1.0
        %v1395 = vadd.f32 %v1331, 1.0
        %v1396 = vadd.f32 %v1332, 1.0
        %v1397 = vadd.f32 %v1333, 1.0
        %v1398 = vadd.f32 %v1334, 1.0
        %v1399 = vadd.f32 %v1335, 1.0
        %v1400 = vadd.f32 %v1336, 1.0
        %v1401 = vadd.f32 %v1337, 1.0
        %v1402 = vadd.f32 %v1338, 1.0
        %v1403 = vadd.f32 %v1339, 1.0
        %v1404 = vadd.f32 %v1340, 1.0
        %v1405 = vadd.f32 %v1341, 1.0
        %v1406 = vadd.f32 %v1342, 1.0
        %v1407 = vlog2.pop %v1343
        %v1408 = vmul.f32 %v1407, 0.6931472
        %v1409 = vlog2.pop %v1344
        %v1410 = vmul.f32 %v1409, 0.6931472
        %v1411 = vlog2.pop %v1345
        %v1412 = vmul.f32 %v1411, 0.6931472
        %v1413 = vlog2.pop %v1346
        %v1414 = vmul.f32 %v1413, 0.6931472
        %v1415 = vlog2.pop %v1347
        %v1416 = vmul.f32 %v1415, 0.6931472
        %v1417 = vlog2.pop %v1348
        %v1418 = vmul.f32 %v1417, 0.6931472
        %v1419 = vlog2.pop %v1349
        %v1420 = vmul.f32 %v1419, 0.6931472
        %v1421 = vlog2.pop %v1350
        %v1422 = vmul.f32 %v1421, 0.6931472
        %v1423 = vlog2.pop %v1351
        %v1424 = vmul.f32 %v1423, 0.6931472
        %v1425 = vlog2.pop %v1352
        %v1426 = vmul.f32 %v1425, 0.6931472
        %v1427 = vlog2.pop %v1353
        %v1428 = vmul.f32 %v1427, 0.6931472
        %v1429 = vlog2.pop %v1354
        %v1430 = vmul.f32 %v1429, 0.6931472
        %v1431 = vlog2.pop %v1355
        %v1432 = vmul.f32 %v1431, 0.6931472
        %v1433 = vlog2.pop %v1356
        %v1434 = vmul.f32 %v1433, 0.6931472
        %v1435 = vlog2.pop %v1357
        %v1436 = vmul.f32 %v1435, 0.6931472
        %v1437 = vlog2.pop %v1358
        %v1438 = vmul.f32 %v1437, 0.6931472
        %v1439 = vlog2.pop %v1359
        %v1440 = vmul.f32 %v1439, 0.6931472
        %v1441 = vlog2.pop %v1360
        %v1442 = vmul.f32 %v1441, 0.6931472
        %v1443 = vlog2.pop %v1361
        %v1444 = vmul.f32 %v1443, 0.6931472
        %v1445 = vlog2.pop %v1362
        %v1446 = vmul.f32 %v1445, 0.6931472
        %v1447 = vlog2.pop %v1363
        %v1448 = vmul.f32 %v1447, 0.6931472
        %v1449 = vlog2.pop %v1364
        %v1450 = vmul.f32 %v1449, 0.6931472
        %v1451 = vlog2.pop %v1365
        %v1452 = vmul.f32 %v1451, 0.6931472
        %v1453 = vlog2.pop %v1366
        %v1454 = vmul.f32 %v1453, 0.6931472
        %v1455 = vlog2.pop %v1367
        %v1456 = vmul.f32 %v1455, 0.6931472
        %v1457 = vlog2.pop %v1368
        %v1458 = vmul.f32 %v1457, 0.6931472
        %v1459 = vlog2.pop %v1369
        %v1460 = vmul.f32 %v1459, 0.6931472
        %v1461 = vlog2.pop %v1370
        %v1462 = vmul.f32 %v1461, 0.6931472
        %v1463 = vlog2.pop %v1371
        %v1464 = vmul.f32 %v1463, 0.6931472
        %v1465 = vlog2.pop %v1372
        %v1466 = vmul.f32 %v1465, 0.6931472
        %v1467 = vlog2.pop %v1373
        %v1468 = vmul.f32 %v1467, 0.6931472
        %v1469 = vlog2.pop %v1374
        %v1470 = vmul.f32 %v1469, 0.6931472
        %v1471 = vlog2.pop %v1375
        %v1472 = vmul.f32 %v1471, 0.6931472
        %v1473 = vlog2.pop %v1376
        %v1474 = vmul.f32 %v1473, 0.6931472
        %v1475 = vlog2.pop %v1377
        %v1476 = vmul.f32 %v1475, 0.6931472
        %v1477 = vlog2.pop %v1378
        %v1478 = vmul.f32 %v1477, 0.6931472
        %v1479 = vlog2.pop %v1379
        %v1480 = vmul.f32 %v1479, 0.6931472
        %v1481 = vlog2.pop %v1380
        %v1482 = vmul.f32 %v1481, 0.6931472
        %v1483 = vlog2.pop %v1381
        %v1484 = vmul.f32 %v1483, 0.6931472
        %v1485 = vlog2.pop %v1382
        %v1486 = vmul.f32 %v1485, 0.6931472
        %v1487 = vlog2.pop %v1383
        %v1488 = vmul.f32 %v1487, 0.6931472
        %v1489 = vlog2.pop %v1384
        %v1490 = vmul.f32 %v1489, 0.6931472
        %v1491 = vlog2.pop %v1385
        %v1492 = vmul.f32 %v1491, 0.6931472
        %v1493 = vlog2.pop %v1386
        %v1494 = vmul.f32 %v1493, 0.6931472
        %v1495 = vlog2.pop %v1387
        %v1496 = vmul.f32 %v1495, 0.6931472
        %v1497 = vlog2.pop %v1388
        %v1498 = vmul.f32 %v1497, 0.6931472
        %v1499 = vlog2.pop %v1389
        %v1500 = vmul.f32 %v1499, 0.6931472
        %v1501 = vlog2.pop %v1390
        %v1502 = vmul.f32 %v1501, 0.6931472
        %v1503 = vlog2.pop %v1391
        %v1504 = vmul.f32 %v1503, 0.6931472
        %v1505 = vlog2.pop %v1392
        %v1506 = vmul.f32 %v1505, 0.6931472
        %v1507 = vlog2.pop %v1393
        %v1508 = vmul.f32 %v1507, 0.6931472
        %v1509 = vlog2.pop %v1394
        %v1510 = vmul.f32 %v1509, 0.6931472
        %v1511 = vlog2.pop %v1395
        %v1512 = vmul.f32 %v1511, 0.6931472
        %v1513 = vlog2.pop %v1396
        %v1514 = vmul.f32 %v1513, 0.6931472
        %v1515 = vlog2.pop %v1397
        %v1516 = vmul.f32 %v1515, 0.6931472
        %v1517 = vlog2.pop %v1398
        %v1518 = vmul.f32 %v1517, 0.6931472
        %v1519 = vlog2.pop %v1399
        %v1520 = vmul.f32 %v1519, 0.6931472
        %v1521 = vlog2.pop %v1400
        %v1522 = vmul.f32 %v1521, 0.6931472
        %v1523 = vlog2.pop %v1401
        %v1524 = vmul.f32 %v1523, 0.6931472
        %v1525 = vlog2.pop %v1402
        %v1526 = vmul.f32 %v1525, 0.6931472
        %v1527 = vlog2.pop %v1403
        %v1528 = vmul.f32 %v1527, 0.6931472
        %v1529 = vlog2.pop %v1404
        %v1530 = vmul.f32 %v1529, 0.6931472
        %v1531 = vlog2.pop %v1405
        %v1532 = vmul.f32 %v1531, 0.6931472
        %v1533 = vlog2.pop %v1406
        %v1534 = vmul.f32 %v1533, 0.6931472
        %v1535 = vmul.f32 %v1408, 127.0
        %v1536 = vmul.f32 %v1410, 127.0
        %v1537 = vmul.f32 %v1412, 127.0
        %v1538 = vmul.f32 %v1414, 127.0
        %v1539 = vmul.f32 %v1416, 127.0
        %v1540 = vmul.f32 %v1418, 127.0
        %v1541 = vmul.f32 %v1420, 127.0
        %v1542 = vmul.f32 %v1422, 127.0
        %v1543 = vmul.f32 %v1424, 127.0
        %v1544 = vmul.f32 %v1426, 127.0
        %v1545 = vmul.f32 %v1428, 127.0
        %v1546 = vmul.f32 %v1430, 127.0
        %v1547 = vmul.f32 %v1432, 127.0
        %v1548 = vmul.f32 %v1434, 127.0
        %v1549 = vmul.f32 %v1436, 127.0
        %v1550 = vmul.f32 %v1438, 127.0
        %v1551 = vmul.f32 %v1440, 127.0
        %v1552 = vmul.f32 %v1442, 127.0
        %v1553 = vmul.f32 %v1444, 127.0
        %v1554 = vmul.f32 %v1446, 127.0
        %v1555 = vmul.f32 %v1448, 127.0
        %v1556 = vmul.f32 %v1450, 127.0
        %v1557 = vmul.f32 %v1452, 127.0
        %v1558 = vmul.f32 %v1454, 127.0
        %v1559 = vmul.f32 %v1456, 127.0
        %v1560 = vmul.f32 %v1458, 127.0
        %v1561 = vmul.f32 %v1460, 127.0
        %v1562 = vmul.f32 %v1462, 127.0
        %v1563 = vmul.f32 %v1464, 127.0
        %v1564 = vmul.f32 %v1466, 127.0
        %v1565 = vmul.f32 %v1468, 127.0
        %v1566 = vmul.f32 %v1470, 127.0
        %v1567 = vmul.f32 %v1472, 127.0
        %v1568 = vmul.f32 %v1474, 127.0
        %v1569 = vmul.f32 %v1476, 127.0
        %v1570 = vmul.f32 %v1478, 127.0
        %v1571 = vmul.f32 %v1480, 127.0
        %v1572 = vmul.f32 %v1482, 127.0
        %v1573 = vmul.f32 %v1484, 127.0
        %v1574 = vmul.f32 %v1486, 127.0
        %v1575 = vmul.f32 %v1488, 127.0
        %v1576 = vmul.f32 %v1490, 127.0
        %v1577 = vmul.f32 %v1492, 127.0
        %v1578 = vmul.f32 %v1494, 127.0
        %v1579 = vmul.f32 %v1496, 127.0
        %v1580 = vmul.f32 %v1498, 127.0
        %v1581 = vmul.f32 %v1500, 127.0
        %v1582 = vmul.f32 %v1502, 127.0
        %v1583 = vmul.f32 %v1504, 127.0
        %v1584 = vmul.f32 %v1506, 127.0
        %v1585 = vmul.f32 %v1508, 127.0
        %v1586 = vmul.f32 %v1510, 127.0
        %v1587 = vmul.f32 %v1512, 127.0
        %v1588 = vmul.f32 %v1514, 127.0
        %v1589 = vmul.f32 %v1516, 127.0
        %v1590 = vmul.f32 %v1518, 127.0
        %v1591 = vmul.f32 %v1520, 127.0
        %v1592 = vmul.f32 %v1522, 127.0
        %v1593 = vmul.f32 %v1524, 127.0
        %v1594 = vmul.f32 %v1526, 127.0
        %v1595 = vmul.f32 %v1528, 127.0
        %v1596 = vmul.f32 %v1530, 127.0
        %v1597 = vmul.f32 %v1532, 127.0
        %v1598 = vmul.f32 %v1534, 127.0
        %v1599 = vmul.f32 %v1085, %v1279
        %v1600 = vmul.f32 %v1085, %v1280
        %v1601 = vmul.f32 %v1085, %v1281
        %v1602 = vmul.f32 %v1085, %v1282
        %v1603 = vmul.f32 %v1085, %v1283
        %v1604 = vmul.f32 %v1085, %v1284
        %v1605 = vmul.f32 %v1085, %v1285
        %v1606 = vmul.f32 %v1085, %v1286
        %v1607 = vmul.f32 %v1085, %v1287
        %v1608 = vmul.f32 %v1085, %v1288
        %v1609 = vmul.f32 %v1085, %v1289
        %v1610 = vmul.f32 %v1085, %v1290
        %v1611 = vmul.f32 %v1085, %v1291
        %v1612 = vmul.f32 %v1085, %v1292
        %v1613 = vmul.f32 %v1085, %v1293
        %v1614 = vmul.f32 %v1085, %v1294
        %v1615 = vmul.f32 %v1085, %v1295
        %v1616 = vmul.f32 %v1085, %v1296
        %v1617 = vmul.f32 %v1085, %v1297
        %v1618 = vmul.f32 %v1085, %v1298
        %v1619 = vmul.f32 %v1085, %v1299
        %v1620 = vmul.f32 %v1085, %v1300
        %v1621 = vmul.f32 %v1085, %v1301
        %v1622 = vmul.f32 %v1085, %v1302
        %v1623 = vmul.f32 %v1085, %v1303
        %v1624 = vmul.f32 %v1085, %v1304
        %v1625 = vmul.f32 %v1085, %v1305
        %v1626 = vmul.f32 %v1085, %v1306
        %v1627 = vmul.f32 %v1085, %v1307
        %v1628 = vmul.f32 %v1085, %v1308
        %v1629 = vmul.f32 %v1085, %v1309
        %v1630 = vmul.f32 %v1085, %v1310
        %v1631 = vmul.f32 %v1085, %v1311
        %v1632 = vmul.f32 %v1085, %v1312
        %v1633 = vmul.f32 %v1085, %v1313
        %v1634 = vmul.f32 %v1085, %v1314
        %v1635 = vmul.f32 %v1085, %v1315
        %v1636 = vmul.f32 %v1085, %v1316
        %v1637 = vmul.f32 %v1085, %v1317
        %v1638 = vmul.f32 %v1085, %v1318
        %v1639 = vmul.f32 %v1085, %v1319
        %v1640 = vmul.f32 %v1085, %v1320
        %v1641 = vmul.f32 %v1085, %v1321
        %v1642 = vmul.f32 %v1085, %v1322
        %v1643 = vmul.f32 %v1085, %v1323
        %v1644 = vmul.f32 %v1085, %v1324
        %v1645 = vmul.f32 %v1085, %v1325
        %v1646 = vmul.f32 %v1085, %v1326
        %v1647 = vmul.f32 %v1085, %v1327
        %v1648 = vmul.f32 %v1085, %v1328
        %v1649 = vmul.f32 %v1085, %v1329
        %v1650 = vmul.f32 %v1085, %v1330
        %v1651 = vmul.f32 %v1085, %v1331
        %v1652 = vmul.f32 %v1085, %v1332
        %v1653 = vmul.f32 %v1085, %v1333
        %v1654 = vmul.f32 %v1085, %v1334
        %v1655 = vmul.f32 %v1085, %v1335
        %v1656 = vmul.f32 %v1085, %v1336
        %v1657 = vmul.f32 %v1085, %v1337
        %v1658 = vmul.f32 %v1085, %v1338
        %v1659 = vmul.f32 %v1085, %v1339
        %v1660 = vmul.f32 %v1085, %v1340
        %v1661 = vmul.f32 %v1085, %v1341
        %v1662 = vmul.f32 %v1085, %v1342
        %v1663 = vmul.f32 %v1599, %v1151
        %v1664 = vmul.f32 %v1600, %v1153
        %v1665 = vmul.f32 %v1601, %v1155
        %v1666 = vmul.f32 %v1602, %v1157
        %v1667 = vmul.f32 %v1603, %v1159
        %v1668 = vmul.f32 %v1604, %v1161
        %v1669 = vmul.f32 %v1605, %v1163
        %v1670 = vmul.f32 %v1606, %v1165
        %v1671 = vmul.f32 %v1607, %v1167
        %v1672 = vmul.f32 %v1608, %v1169
        %v1673 = vmul.f32 %v1609, %v1171
        %v1674 = vmul.f32 %v1610, %v1173
        %v1675 = vmul.f32 %v1611, %v1175
        %v1676 = vmul.f32 %v1612, %v1177
        %v1677 = vmul.f32 %v1613, %v1179
        %v1678 = vmul.f32 %v1614, %v1181
        %v1679 = vmul.f32 %v1615, %v1183
        %v1680 = vmul.f32 %v1616, %v1185
        %v1681 = vmul.f32 %v1617, %v1187
        %v1682 = vmul.f32 %v1618, %v1189
        %v1683 = vmul.f32 %v1619, %v1191
        %v1684 = vmul.f32 %v1620, %v1193
        %v1685 = vmul.f32 %v1621, %v1195
        %v1686 = vmul.f32 %v1622, %v1197
        %v1687 = vmul.f32 %v1623, %v1199
        %v1688 = vmul.f32 %v1624, %v1201
        %v1689 = vmul.f32 %v1625, %v1203
        %v1690 = vmul.f32 %v1626, %v1205
        %v1691 = vmul.f32 %v1627, %v1207
        %v1692 = vmul.f32 %v1628, %v1209
        %v1693 = vmul.f32 %v1629, %v1211
        %v1694 = vmul.f32 %v1630, %v1213
        %v1695 = vmul.f32 %v1631, %v1215
        %v1696 = vmul.f32 %v1632, %v1217
        %v1697 = vmul.f32 %v1633, %v1219
        %v1698 = vmul.f32 %v1634, %v1221
        %v1699 = vmul.f32 %v1635, %v1223
        %v1700 = vmul.f32 %v1636, %v1225
        %v1701 = vmul.f32 %v1637, %v1227
        %v1702 = vmul.f32 %v1638, %v1229
        %v1703 = vmul.f32 %v1639, %v1231
        %v1704 = vmul.f32 %v1640, %v1233
        %v1705 = vmul.f32 %v1641, %v1235
        %v1706 = vmul.f32 %v1642, %v1237
        %v1707 = vmul.f32 %v1643, %v1239
        %v1708 = vmul.f32 %v1644, %v1241
        %v1709 = vmul.f32 %v1645, %v1243
        %v1710 = vmul.f32 %v1646, %v1245
        %v1711 = vmul.f32 %v1647, %v1247
        %v1712 = vmul.f32 %v1648, %v1249
        %v1713 = vmul.f32 %v1649, %v1251
        %v1714 = vmul.f32 %v1650, %v1253
        %v1715 = vmul.f32 %v1651, %v1255
        %v1716 = vmul.f32 %v1652, %v1257
        %v1717 = vmul.f32 %v1653, %v1259
        %v1718 = vmul.f32 %v1654, %v1261
        %v1719 = vmul.f32 %v1655, %v1263
        %v1720 = vmul.f32 %v1656, %v1265
        %v1721 = vmul.f32 %v1657, %v1267
        %v1722 = vmul.f32 %v1658, %v1269
        %v1723 = vmul.f32 %v1659, %v1271
        %v1724 = vmul.f32 %v1660, %v1273
        %v1725 = vmul.f32 %v1661, %v1275
        %v1726 = vmul.f32 %v1662, %v1277
        %v1727 = vadd.f32 %v1663, 1.0
        %v1728 = vadd.f32 %v1664, 1.0
        %v1729 = vadd.f32 %v1665, 1.0
        %v1730 = vadd.f32 %v1666, 1.0
        %v1731 = vadd.f32 %v1667, 1.0
        %v1732 = vadd.f32 %v1668, 1.0
        %v1733 = vadd.f32 %v1669, 1.0
        %v1734 = vadd.f32 %v1670, 1.0
        %v1735 = vadd.f32 %v1671, 1.0
        %v1736 = vadd.f32 %v1672, 1.0
        %v1737 = vadd.f32 %v1673, 1.0
        %v1738 = vadd.f32 %v1674, 1.0
        %v1739 = vadd.f32 %v1675, 1.0
        %v1740 = vadd.f32 %v1676, 1.0
        %v1741 = vadd.f32 %v1677, 1.0
        %v1742 = vadd.f32 %v1678, 1.0
        %v1743 = vadd.f32 %v1679, 1.0
        %v1744 = vadd.f32 %v1680, 1.0
        %v1745 = vadd.f32 %v1681, 1.0
        %v1746 = vadd.f32 %v1682, 1.0
        %v1747 = vadd.f32 %v1683, 1.0
        %v1748 = vadd.f32 %v1684, 1.0
        %v1749 = vadd.f32 %v1685, 1.0
        %v1750 = vadd.f32 %v1686, 1.0
        %v1751 = vadd.f32 %v1687, 1.0
        %v1752 = vadd.f32 %v1688, 1.0
        %v1753 = vadd.f32 %v1689, 1.0
        %v1754 = vadd.f32 %v1690, 1.0
        %v1755 = vadd.f32 %v1691, 1.0
        %v1756 = vadd.f32 %v1692, 1.0
        %v1757 = vadd.f32 %v1693, 1.0
        %v1758 = vadd.f32 %v1694, 1.0
        %v1759 = vadd.f32 %v1695, 1.0
        %v1760 = vadd.f32 %v1696, 1.0
        %v1761 = vadd.f32 %v1697, 1.0
        %v1762 = vadd.f32 %v1698, 1.0
        %v1763 = vadd.f32 %v1699, 1.0
        %v1764 = vadd.f32 %v1700, 1.0
        %v1765 = vadd.f32 %v1701, 1.0
        %v1766 = vadd.f32 %v1702, 1.0
        %v1767 = vadd.f32 %v1703, 1.0
        %v1768 = vadd.f32 %v1704, 1.0
        %v1769 = vadd.f32 %v1705, 1.0
        %v1770 = vadd.f32 %v1706, 1.0
        %v1771 = vadd.f32 %v1707, 1.0
        %v1772 = vadd.f32 %v1708, 1.0
        %v1773 = vadd.f32 %v1709, 1.0
        %v1774 = vadd.f32 %v1710, 1.0
        %v1775 = vadd.f32 %v1711, 1.0
        %v1776 = vadd.f32 %v1712, 1.0
        %v1777 = vadd.f32 %v1713, 1.0
        %v1778 = vadd.f32 %v1714, 1.0
        %v1779 = vadd.f32 %v1715, 1.0
        %v1780 = vadd.f32 %v1716, 1.0
        %v1781 = vadd.f32 %v1717, 1.0
        %v1782 = vadd.f32 %v1718, 1.0
        %v1783 = vadd.f32 %v1719, 1.0
        %v1784 = vadd.f32 %v1720, 1.0
        %v1785 = vadd.f32 %v1721, 1.0
        %v1786 = vadd.f32 %v1722, 1.0
        %v1787 = vadd.f32 %v1723, 1.0
        %v1788 = vadd.f32 %v1724, 1.0
        %v1789 = vadd.f32 %v1725, 1.0
        %v1790 = vadd.f32 %v1726, 1.0
        %v1791 = vlog2.pop %v1727
        %v1792 = vmul.f32 %v1791, 0.6931472
        %v1793 = vlog2.pop %v1728
        %v1794 = vmul.f32 %v1793, 0.6931472
        %v1795 = vlog2.pop %v1729
        %v1796 = vmul.f32 %v1795, 0.6931472
        %v1797 = vlog2.pop %v1730
        %v1798 = vmul.f32 %v1797, 0.6931472
        %v1799 = vlog2.pop %v1731
        %v1800 = vmul.f32 %v1799, 0.6931472
        %v1801 = vlog2.pop %v1732
        %v1802 = vmul.f32 %v1801, 0.6931472
        %v1803 = vlog2.pop %v1733
        %v1804 = vmul.f32 %v1803, 0.6931472
        %v1805 = vlog2.pop %v1734
        %v1806 = vmul.f32 %v1805, 0.6931472
        %v1807 = vlog2.pop %v1735
        %v1808 = vmul.f32 %v1807, 0.6931472
        %v1809 = vlog2.pop %v1736
        %v1810 = vmul.f32 %v1809, 0.6931472
        %v1811 = vlog2.pop %v1737
        %v1812 = vmul.f32 %v1811, 0.6931472
        %v1813 = vlog2.pop %v1738
        %v1814 = vmul.f32 %v1813, 0.6931472
        %v1815 = vlog2.pop %v1739
        %v1816 = vmul.f32 %v1815, 0.6931472
        %v1817 = vlog2.pop %v1740
        %v1818 = vmul.f32 %v1817, 0.6931472
        %v1819 = vlog2.pop %v1741
        %v1820 = vmul.f32 %v1819, 0.6931472
        %v1821 = vlog2.pop %v1742
        %v1822 = vmul.f32 %v1821, 0.6931472
        %v1823 = vlog2.pop %v1743
        %v1824 = vmul.f32 %v1823, 0.6931472
        %v1825 = vlog2.pop %v1744
        %v1826 = vmul.f32 %v1825, 0.6931472
        %v1827 = vlog2.pop %v1745
        %v1828 = vmul.f32 %v1827, 0.6931472
        %v1829 = vlog2.pop %v1746
        %v1830 = vmul.f32 %v1829, 0.6931472
        %v1831 = vlog2.pop %v1747
        %v1832 = vmul.f32 %v1831, 0.6931472
        %v1833 = vlog2.pop %v1748
        %v1834 = vmul.f32 %v1833, 0.6931472
        %v1835 = vlog2.pop %v1749
        %v1836 = vmul.f32 %v1835, 0.6931472
        %v1837 = vlog2.pop %v1750
        %v1838 = vmul.f32 %v1837, 0.6931472
        %v1839 = vlog2.pop %v1751
        %v1840 = vmul.f32 %v1839, 0.6931472
        %v1841 = vlog2.pop %v1752
        %v1842 = vmul.f32 %v1841, 0.6931472
        %v1843 = vlog2.pop %v1753
        %v1844 = vmul.f32 %v1843, 0.6931472
        %v1845 = vlog2.pop %v1754
        %v1846 = vmul.f32 %v1845, 0.6931472
        %v1847 = vlog2.pop %v1755
        %v1848 = vmul.f32 %v1847, 0.6931472
        %v1849 = vlog2.pop %v1756
        %v1850 = vmul.f32 %v1849, 0.6931472
        %v1851 = vlog2.pop %v1757
        %v1852 = vmul.f32 %v1851, 0.6931472
        %v1853 = vlog2.pop %v1758
        %v1854 = vmul.f32 %v1853, 0.6931472
        %v1855 = vlog2.pop %v1759
        %v1856 = vmul.f32 %v1855, 0.6931472
        %v1857 = vlog2.pop %v1760
        %v1858 = vmul.f32 %v1857, 0.6931472
        %v1859 = vlog2.pop %v1761
        %v1860 = vmul.f32 %v1859, 0.6931472
        %v1861 = vlog2.pop %v1762
        %v1862 = vmul.f32 %v1861, 0.6931472
        %v1863 = vlog2.pop %v1763
        %v1864 = vmul.f32 %v1863, 0.6931472
        %v1865 = vlog2.pop %v1764
        %v1866 = vmul.f32 %v1865, 0.6931472
        %v1867 = vlog2.pop %v1765
        %v1868 = vmul.f32 %v1867, 0.6931472
        %v1869 = vlog2.pop %v1766
        %v1870 = vmul.f32 %v1869, 0.6931472
        %v1871 = vlog2.pop %v1767
        %v1872 = vmul.f32 %v1871, 0.6931472
        %v1873 = vlog2.pop %v1768
        %v1874 = vmul.f32 %v1873, 0.6931472
        %v1875 = vlog2.pop %v1769
        %v1876 = vmul.f32 %v1875, 0.6931472
        %v1877 = vlog2.pop %v1770
        %v1878 = vmul.f32 %v1877, 0.6931472
        %v1879 = vlog2.pop %v1771
        %v1880 = vmul.f32 %v1879, 0.6931472
        %v1881 = vlog2.pop %v1772
        %v1882 = vmul.f32 %v1881, 0.6931472
        %v1883 = vlog2.pop %v1773
        %v1884 = vmul.f32 %v1883, 0.6931472
        %v1885 = vlog2.pop %v1774
        %v1886 = vmul.f32 %v1885, 0.6931472
        %v1887 = vlog2.pop %v1775
        %v1888 = vmul.f32 %v1887, 0.6931472
        %v1889 = vlog2.pop %v1776
        %v1890 = vmul.f32 %v1889, 0.6931472
        %v1891 = vlog2.pop %v1777
        %v1892 = vmul.f32 %v1891, 0.6931472
        %v1893 = vlog2.pop %v1778
        %v1894 = vmul.f32 %v1893, 0.6931472
        %v1895 = vlog2.pop %v1779
        %v1896 = vmul.f32 %v1895, 0.6931472
        %v1897 = vlog2.pop %v1780
        %v1898 = vmul.f32 %v1897, 0.6931472
        %v1899 = vlog2.pop %v1781
        %v1900 = vmul.f32 %v1899, 0.6931472
        %v1901 = vlog2.pop %v1782
        %v1902 = vmul.f32 %v1901, 0.6931472
        %v1903 = vlog2.pop %v1783
        %v1904 = vmul.f32 %v1903, 0.6931472
        %v1905 = vlog2.pop %v1784
        %v1906 = vmul.f32 %v1905, 0.6931472
        %v1907 = vlog2.pop %v1785
        %v1908 = vmul.f32 %v1907, 0.6931472
        %v1909 = vlog2.pop %v1786
        %v1910 = vmul.f32 %v1909, 0.6931472
        %v1911 = vlog2.pop %v1787
        %v1912 = vmul.f32 %v1911, 0.6931472
        %v1913 = vlog2.pop %v1788
        %v1914 = vmul.f32 %v1913, 0.6931472
        %v1915 = vlog2.pop %v1789
        %v1916 = vmul.f32 %v1915, 0.6931472
        %v1917 = vlog2.pop %v1790
        %v1918 = vmul.f32 %v1917, 0.6931472
        %v1919 = vadd.f32 %v1535, %v1792
        %v1920 = vadd.f32 %v1536, %v1794
        %v1921 = vadd.f32 %v1537, %v1796
        %v1922 = vadd.f32 %v1538, %v1798
        %v1923 = vadd.f32 %v1539, %v1800
        %v1924 = vadd.f32 %v1540, %v1802
        %v1925 = vadd.f32 %v1541, %v1804
        %v1926 = vadd.f32 %v1542, %v1806
        %v1927 = vadd.f32 %v1543, %v1808
        %v1928 = vadd.f32 %v1544, %v1810
        %v1929 = vadd.f32 %v1545, %v1812
        %v1930 = vadd.f32 %v1546, %v1814
        %v1931 = vadd.f32 %v1547, %v1816
        %v1932 = vadd.f32 %v1548, %v1818
        %v1933 = vadd.f32 %v1549, %v1820
        %v1934 = vadd.f32 %v1550, %v1822
        %v1935 = vadd.f32 %v1551, %v1824
        %v1936 = vadd.f32 %v1552, %v1826
        %v1937 = vadd.f32 %v1553, %v1828
        %v1938 = vadd.f32 %v1554, %v1830
        %v1939 = vadd.f32 %v1555, %v1832
        %v1940 = vadd.f32 %v1556, %v1834
        %v1941 = vadd.f32 %v1557, %v1836
        %v1942 = vadd.f32 %v1558, %v1838
        %v1943 = vadd.f32 %v1559, %v1840
        %v1944 = vadd.f32 %v1560, %v1842
        %v1945 = vadd.f32 %v1561, %v1844
        %v1946 = vadd.f32 %v1562, %v1846
        %v1947 = vadd.f32 %v1563, %v1848
        %v1948 = vadd.f32 %v1564, %v1850
        %v1949 = vadd.f32 %v1565, %v1852
        %v1950 = vadd.f32 %v1566, %v1854
        %v1951 = vadd.f32 %v1567, %v1856
        %v1952 = vadd.f32 %v1568, %v1858
        %v1953 = vadd.f32 %v1569, %v1860
        %v1954 = vadd.f32 %v1570, %v1862
        %v1955 = vadd.f32 %v1571, %v1864
        %v1956 = vadd.f32 %v1572, %v1866
        %v1957 = vadd.f32 %v1573, %v1868
        %v1958 = vadd.f32 %v1574, %v1870
        %v1959 = vadd.f32 %v1575, %v1872
        %v1960 = vadd.f32 %v1576, %v1874
        %v1961 = vadd.f32 %v1577, %v1876
        %v1962 = vadd.f32 %v1578, %v1878
        %v1963 = vadd.f32 %v1579, %v1880
        %v1964 = vadd.f32 %v1580, %v1882
        %v1965 = vadd.f32 %v1581, %v1884
        %v1966 = vadd.f32 %v1582, %v1886
        %v1967 = vadd.f32 %v1583, %v1888
        %v1968 = vadd.f32 %v1584, %v1890
        %v1969 = vadd.f32 %v1585, %v1892
        %v1970 = vadd.f32 %v1586, %v1894
        %v1971 = vadd.f32 %v1587, %v1896
        %v1972 = vadd.f32 %v1588, %v1898
        %v1973 = vadd.f32 %v1589, %v1900
        %v1974 = vadd.f32 %v1590, %v1902
        %v1975 = vadd.f32 %v1591, %v1904
        %v1976 = vadd.f32 %v1592, %v1906
        %v1977 = vadd.f32 %v1593, %v1908
        %v1978 = vadd.f32 %v1594, %v1910
        %v1979 = vadd.f32 %v1595, %v1912
        %v1980 = vadd.f32 %v1596, %v1914
        %v1981 = vadd.f32 %v1597, %v1916
        %v1982 = vadd.f32 %v1598, %v1918
        %v1983 = vmul.f32 %v1278, %v317
        %v1984 = vmul.f32 %v1278, %v318
        %v1985 = vmul.f32 %v1278, %v319
        %v1986 = vmul.f32 %v1278, %v320
        %v1987 = vmul.f32 %v1278, %v321
        %v1988 = vmul.f32 %v1278, %v322
        %v1989 = vmul.f32 %v1278, %v323
        %v1990 = vmul.f32 %v1278, %v324
        %v1991 = vmul.f32 %v1278, %v325
        %v1992 = vmul.f32 %v1278, %v326
        %v1993 = vmul.f32 %v1278, %v327
        %v1994 = vmul.f32 %v1278, %v328
        %v1995 = vmul.f32 %v1278, %v329
        %v1996 = vmul.f32 %v1278, %v330
        %v1997 = vmul.f32 %v1278, %v331
        %v1998 = vmul.f32 %v1278, %v332
        %v1999 = vmul.f32 %v1278, %v333
        %v2000 = vmul.f32 %v1278, %v334
        %v2001 = vmul.f32 %v1278, %v335
        %v2002 = vmul.f32 %v1278, %v336
        %v2003 = vmul.f32 %v1278, %v337
        %v2004 = vmul.f32 %v1278, %v338
        %v2005 = vmul.f32 %v1278, %v339
        %v2006 = vmul.f32 %v1278, %v340
        %v2007 = vmul.f32 %v1278, %v341
        %v2008 = vmul.f32 %v1278, %v342
        %v2009 = vmul.f32 %v1278, %v343
        %v2010 = vmul.f32 %v1278, %v344
        %v2011 = vmul.f32 %v1278, %v345
        %v2012 = vmul.f32 %v1278, %v346
        %v2013 = vmul.f32 %v1278, %v347
        %v2014 = vmul.f32 %v1278, %v348
        %v2015 = vmul.f32 %v1278, %v349
        %v2016 = vmul.f32 %v1278, %v350
        %v2017 = vmul.f32 %v1278, %v351
        %v2018 = vmul.f32 %v1278, %v352
        %v2019 = vmul.f32 %v1278, %v353
        %v2020 = vmul.f32 %v1278, %v354
        %v2021 = vmul.f32 %v1278, %v355
        %v2022 = vmul.f32 %v1278, %v356
        %v2023 = vmul.f32 %v1278, %v357
        %v2024 = vmul.f32 %v1278, %v358
        %v2025 = vmul.f32 %v1278, %v359
        %v2026 = vmul.f32 %v1278, %v360
        %v2027 = vmul.f32 %v1278, %v361
        %v2028 = vmul.f32 %v1278, %v362
        %v2029 = vmul.f32 %v1278, %v363
        %v2030 = vmul.f32 %v1278, %v364
        %v2031 = vmul.f32 %v1278, %v365
        %v2032 = vmul.f32 %v1278, %v366
        %v2033 = vmul.f32 %v1278, %v367
        %v2034 = vmul.f32 %v1278, %v368
        %v2035 = vmul.f32 %v1278, %v369
        %v2036 = vmul.f32 %v1278, %v370
        %v2037 = vmul.f32 %v1278, %v371
        %v2038 = vmul.f32 %v1278, %v372
        %v2039 = vmul.f32 %v1278, %v373
        %v2040 = vmul.f32 %v1278, %v374
        %v2041 = vmul.f32 %v1278, %v375
        %v2042 = vmul.f32 %v1278, %v376
        %v2043 = vmul.f32 %v1278, %v377
        %v2044 = vmul.f32 %v1278, %v378
        %v2045 = vmul.f32 %v1278, %v379
        %v2046 = vmul.f32 %v1278, %v380
        %v2047 = vmul.f32 %v1983, %v1151
        %v2048 = vmul.f32 %v1984, %v1153
        %v2049 = vmul.f32 %v1985, %v1155
        %v2050 = vmul.f32 %v1986, %v1157
        %v2051 = vmul.f32 %v1987, %v1159
        %v2052 = vmul.f32 %v1988, %v1161
        %v2053 = vmul.f32 %v1989, %v1163
        %v2054 = vmul.f32 %v1990, %v1165
        %v2055 = vmul.f32 %v1991, %v1167
        %v2056 = vmul.f32 %v1992, %v1169
        %v2057 = vmul.f32 %v1993, %v1171
        %v2058 = vmul.f32 %v1994, %v1173
        %v2059 = vmul.f32 %v1995, %v1175
        %v2060 = vmul.f32 %v1996, %v1177
        %v2061 = vmul.f32 %v1997, %v1179
        %v2062 = vmul.f32 %v1998, %v1181
        %v2063 = vmul.f32 %v1999, %v1183
        %v2064 = vmul.f32 %v2000, %v1185
        %v2065 = vmul.f32 %v2001, %v1187
        %v2066 = vmul.f32 %v2002, %v1189
        %v2067 = vmul.f32 %v2003, %v1191
        %v2068 = vmul.f32 %v2004, %v1193
        %v2069 = vmul.f32 %v2005, %v1195
        %v2070 = vmul.f32 %v2006, %v1197
        %v2071 = vmul.f32 %v2007, %v1199
        %v2072 = vmul.f32 %v2008, %v1201
        %v2073 = vmul.f32 %v2009, %v1203
        %v2074 = vmul.f32 %v2010, %v1205
        %v2075 = vmul.f32 %v2011, %v1207
        %v2076 = vmul.f32 %v2012, %v1209
        %v2077 = vmul.f32 %v2013, %v1211
        %v2078 = vmul.f32 %v2014, %v1213
        %v2079 = vmul.f32 %v2015, %v1215
        %v2080 = vmul.f32 %v2016, %v1217
        %v2081 = vmul.f32 %v2017, %v1219
        %v2082 = vmul.f32 %v2018, %v1221
        %v2083 = vmul.f32 %v2019, %v1223
        %v2084 = vmul.f32 %v2020, %v1225
        %v2085 = vmul.f32 %v2021, %v1227
        %v2086 = vmul.f32 %v2022, %v1229
        %v2087 = vmul.f32 %v2023, %v1231
        %v2088 = vmul.f32 %v2024, %v1233
        %v2089 = vmul.f32 %v2025, %v1235
        %v2090 = vmul.f32 %v2026, %v1237
        %v2091 = vmul.f32 %v2027, %v1239
        %v2092 = vmul.f32 %v2028, %v1241
        %v2093 = vmul.f32 %v2029, %v1243
        %v2094 = vmul.f32 %v2030, %v1245
        %v2095 = vmul.f32 %v2031, %v1247
        %v2096 = vmul.f32 %v2032, %v1249
        %v2097 = vmul.f32 %v2033, %v1251
        %v2098 = vmul.f32 %v2034, %v1253
        %v2099 = vmul.f32 %v2035, %v1255
        %v2100 = vmul.f32 %v2036, %v1257
        %v2101 = vmul.f32 %v2037, %v1259
        %v2102 = vmul.f32 %v2038, %v1261
        %v2103 = vmul.f32 %v2039, %v1263
        %v2104 = vmul.f32 %v2040, %v1265
        %v2105 = vmul.f32 %v2041, %v1267
        %v2106 = vmul.f32 %v2042, %v1269
        %v2107 = vmul.f32 %v2043, %v1271
        %v2108 = vmul.f32 %v2044, %v1273
        %v2109 = vmul.f32 %v2045, %v1275
        %v2110 = vmul.f32 %v2046, %v1277
        %v2111 = vadd.f32 %v246, %v2047
        %v2112 = vadd.f32 %v247, %v2048
        %v2113 = vadd.f32 %v248, %v2049
        %v2114 = vadd.f32 %v249, %v2050
        %v2115 = vadd.f32 %v250, %v2051
        %v2116 = vadd.f32 %v251, %v2052
        %v2117 = vadd.f32 %v252, %v2053
        %v2118 = vadd.f32 %v253, %v2054
        %v2119 = vadd.f32 %v254, %v2055
        %v2120 = vadd.f32 %v255, %v2056
        %v2121 = vadd.f32 %v256, %v2057
        %v2122 = vadd.f32 %v257, %v2058
        %v2123 = vadd.f32 %v258, %v2059
        %v2124 = vadd.f32 %v259, %v2060
        %v2125 = vadd.f32 %v260, %v2061
        %v2126 = vadd.f32 %v261, %v2062
        %v2127 = vadd.f32 %v262, %v2063
        %v2128 = vadd.f32 %v263, %v2064
        %v2129 = vadd.f32 %v264, %v2065
        %v2130 = vadd.f32 %v265, %v2066
        %v2131 = vadd.f32 %v266, %v2067
        %v2132 = vadd.f32 %v267, %v2068
        %v2133 = vadd.f32 %v268, %v2069
        %v2134 = vadd.f32 %v269, %v2070
        %v2135 = vadd.f32 %v270, %v2071
        %v2136 = vadd.f32 %v271, %v2072
        %v2137 = vadd.f32 %v272, %v2073
        %v2138 = vadd.f32 %v273, %v2074
        %v2139 = vadd.f32 %v274, %v2075
        %v2140 = vadd.f32 %v275, %v2076
        %v2141 = vadd.f32 %v276, %v2077
        %v2142 = vadd.f32 %v277, %v2078
        %v2143 = vadd.f32 %v278, %v2079
        %v2144 = vadd.f32 %v279, %v2080
        %v2145 = vadd.f32 %v280, %v2081
        %v2146 = vadd.f32 %v281, %v2082
        %v2147 = vadd.f32 %v282, %v2083
        %v2148 = vadd.f32 %v283, %v2084
        %v2149 = vadd.f32 %v284, %v2085
        %v2150 = vadd.f32 %v285, %v2086
        %v2151 = vadd.f32 %v286, %v2087
        %v2152 = vadd.f32 %v287, %v2088
        %v2153 = vadd.f32 %v288, %v2089
        %v2154 = vadd.f32 %v289, %v2090
        %v2155 = vadd.f32 %v290, %v2091
        %v2156 = vadd.f32 %v291, %v2092
        %v2157 = vadd.f32 %v292, %v2093
        %v2158 = vadd.f32 %v293, %v2094
        %v2159 = vadd.f32 %v294, %v2095
        %v2160 = vadd.f32 %v295, %v2096
        %v2161 = vadd.f32 %v296, %v2097
        %v2162 = vadd.f32 %v297, %v2098
        %v2163 = vadd.f32 %v298, %v2099
        %v2164 = vadd.f32 %v299, %v2100
        %v2165 = vadd.f32 %v300, %v2101
        %v2166 = vadd.f32 %v301, %v2102
        %v2167 = vadd.f32 %v302, %v2103
        %v2168 = vadd.f32 %v303, %v2104
        %v2169 = vadd.f32 %v304, %v2105
        %v2170 = vadd.f32 %v305, %v2106
        %v2171 = vadd.f32 %v306, %v2107
        %v2172 = vadd.f32 %v307, %v2108
        %v2173 = vadd.f32 %v308, %v2109
        %v2174 = vadd.f32 %v309, %v2110
        %2175 = vst [vmem:[%s228] sm:$0xff] %v2111
        %2176 = vst [vmem:[%s228 + $0x8] sm:$0xff] %v2112
        %2177 = vst [vmem:[%s228 + $0x10] sm:$0xff] %v2113
        %2178 = vst [vmem:[%s228 + $0x18] sm:$0xff] %v2114
        %2179 = vst [vmem:[%s228 + $0x20] sm:$0xff] %v2115
        %2180 = vst [vmem:[%s228 + $0x28] sm:$0xff] %v2116
        %2181 = vst [vmem:[%s228 + $0x30] sm:$0xff] %v2117
        %2182 = vst [vmem:[%s228 + $0x38] sm:$0xff] %v2118
        %2183 = vst [vmem:[%s228 + $0x40] sm:$0xff] %v2119
        %2184 = vst [vmem:[%s228 + $0x48] sm:$0xff] %v2120
        %2185 = vst [vmem:[%s228 + $0x50] sm:$0xff] %v2121
        %2186 = vst [vmem:[%s228 + $0x58] sm:$0xff] %v2122
        %2187 = vst [vmem:[%s228 + $0x60] sm:$0xff] %v2123
        %2188 = vst [vmem:[%s228 + $0x68] sm:$0xff] %v2124
        %2189 = vst [vmem:[%s228 + $0x70] sm:$0xff] %v2125
        %2190 = vst [vmem:[%s228 + $0x78] sm:$0xff] %v2126
        %2191 = vst [vmem:[%s228 + $0x80] sm:$0xff] %v2127
        %2192 = vst [vmem:[%s228 + $0x88] sm:$0xff] %v2128
        %2193 = vst [vmem:[%s228 + $0x90] sm:$0xff] %v2129
        %2194 = vst [vmem:[%s228 + $0x98] sm:$0xff] %v2130
        %2195 = vst [vmem:[%s228 + $0xa0] sm:$0xff] %v2131
        %2196 = vst [vmem:[%s228 + $0xa8] sm:$0xff] %v2132
        %2197 = vst [vmem:[%s228 + $0xb0] sm:$0xff] %v2133
        %2198 = vst [vmem:[%s228 + $0xb8] sm:$0xff] %v2134
        %2199 = vst [vmem:[%s228 + $0xc0] sm:$0xff] %v2135
        %2200 = vst [vmem:[%s228 + $0xc8] sm:$0xff] %v2136
        %2201 = vst [vmem:[%s228 + $0xd0] sm:$0xff] %v2137
        %2202 = vst [vmem:[%s228 + $0xd8] sm:$0xff] %v2138
        %2203 = vst [vmem:[%s228 + $0xe0] sm:$0xff] %v2139
        %2204 = vst [vmem:[%s228 + $0xe8] sm:$0xff] %v2140
        %2205 = vst [vmem:[%s228 + $0xf0] sm:$0xff] %v2141
        %2206 = vst [vmem:[%s228 + $0xf8] sm:$0xff] %v2142
        %2207 = vst [vmem:[%s228 + $0x100] sm:$0xff] %v2143
        %2208 = vst [vmem:[%s228 + $0x108] sm:$0xff] %v2144
        %2209 = vst [vmem:[%s228 + $0x110] sm:$0xff] %v2145
        %2210 = vst [vmem:[%s228 + $0x118] sm:$0xff] %v2146
        %2211 = vst [vmem:[%s228 + $0x120] sm:$0xff] %v2147
        %2212 = vst [vmem:[%s228 + $0x128] sm:$0xff] %v2148
        %2213 = vst [vmem:[%s228 + $0x130] sm:$0xff] %v2149
        %2214 = vst [vmem:[%s228 + $0x138] sm:$0xff] %v2150
        %2215 = vst [vmem:[%s228 + $0x140] sm:$0xff] %v2151
        %2216 = vst [vmem:[%s228 + $0x148] sm:$0xff] %v2152
        %2217 = vst [vmem:[%s228 + $0x150] sm:$0xff] %v2153
        %2218 = vst [vmem:[%s228 + $0x158] sm:$0xff] %v2154
        %2219 = vst [vmem:[%s228 + $0x160] sm:$0xff] %v2155
        %2220 = vst [vmem:[%s228 + $0x168] sm:$0xff] %v2156
        %2221 = vst [vmem:[%s228 + $0x170] sm:$0xff] %v2157
        %2222 = vst [vmem:[%s228 + $0x178] sm:$0xff] %v2158
        %2223 = vst [vmem:[%s228 + $0x180] sm:$0xff] %v2159
        %2224 = vst [vmem:[%s228 + $0x188] sm:$0xff] %v2160
        %2225 = vst [vmem:[%s228 + $0x190] sm:$0xff] %v2161
        %2226 = vst [vmem:[%s228 + $0x198] sm:$0xff] %v2162
        %2227 = vst [vmem:[%s228 + $0x1a0] sm:$0xff] %v2163
        %2228 = vst [vmem:[%s228 + $0x1a8] sm:$0xff] %v2164
        %2229 = vst [vmem:[%s228 + $0x1b0] sm:$0xff] %v2165
        %2230 = vst [vmem:[%s228 + $0x1b8] sm:$0xff] %v2166
        %2231 = vst [vmem:[%s228 + $0x1c0] sm:$0xff] %v2167
        %2232 = vst [vmem:[%s228 + $0x1c8] sm:$0xff] %v2168
        %2233 = vst [vmem:[%s228 + $0x1d0] sm:$0xff] %v2169
        %2234 = vst [vmem:[%s228 + $0x1d8] sm:$0xff] %v2170
        %2235 = vst [vmem:[%s228 + $0x1e0] sm:$0xff] %v2171
        %2236 = vst [vmem:[%s228 + $0x1e8] sm:$0xff] %v2172
        %2237 = vst [vmem:[%s228 + $0x1f0] sm:$0xff] %v2173
        %2238 = vst [vmem:[%s228 + $0x1f8] sm:$0xff] %v2174
        %vm2239 = vcmask 7168
        %2240 = vst.msk [vmem:[%s242] sm:$0xff] %vm2239, %v1919
        %2241 = vst.msk [vmem:[%s242 + $0x8] sm:$0xff] %vm2239, %v1920
        %2242 = vst.msk [vmem:[%s242 + $0x10] sm:$0xff] %vm2239, %v1921
        %2243 = vst.msk [vmem:[%s242 + $0x18] sm:$0xff] %vm2239, %v1922
        %2244 = vst.msk [vmem:[%s242 + $0x20] sm:$0xff] %vm2239, %v1923
        %2245 = vst.msk [vmem:[%s242 + $0x28] sm:$0xff] %vm2239, %v1924
        %2246 = vst.msk [vmem:[%s242 + $0x30] sm:$0xff] %vm2239, %v1925
        %2247 = vst.msk [vmem:[%s242 + $0x38] sm:$0xff] %vm2239, %v1926
        %2248 = vst.msk [vmem:[%s242 + $0x40] sm:$0xff] %vm2239, %v1927
        %2249 = vst.msk [vmem:[%s242 + $0x48] sm:$0xff] %vm2239, %v1928
        %2250 = vst.msk [vmem:[%s242 + $0x50] sm:$0xff] %vm2239, %v1929
        %2251 = vst.msk [vmem:[%s242 + $0x58] sm:$0xff] %vm2239, %v1930
        %2252 = vst.msk [vmem:[%s242 + $0x60] sm:$0xff] %vm2239, %v1931
        %2253 = vst.msk [vmem:[%s242 + $0x68] sm:$0xff] %vm2239, %v1932
        %2254 = vst.msk [vmem:[%s242 + $0x70] sm:$0xff] %vm2239, %v1933
        %2255 = vst.msk [vmem:[%s242 + $0x78] sm:$0xff] %vm2239, %v1934
        %2256 = vst.msk [vmem:[%s242 + $0x80] sm:$0xff] %vm2239, %v1935
        %2257 = vst.msk [vmem:[%s242 + $0x88] sm:$0xff] %vm2239, %v1936
        %2258 = vst.msk [vmem:[%s242 + $0x90] sm:$0xff] %vm2239, %v1937
        %2259 = vst.msk [vmem:[%s242 + $0x98] sm:$0xff] %vm2239, %v1938
        %2260 = vst.msk [vmem:[%s242 + $0xa0] sm:$0xff] %vm2239, %v1939
        %2261 = vst.msk [vmem:[%s242 + $0xa8] sm:$0xff] %vm2239, %v1940
        %2262 = vst.msk [vmem:[%s242 + $0xb0] sm:$0xff] %vm2239, %v1941
        %2263 = vst.msk [vmem:[%s242 + $0xb8] sm:$0xff] %vm2239, %v1942
        %2264 = vst.msk [vmem:[%s242 + $0xc0] sm:$0xff] %vm2239, %v1943
        %2265 = vst.msk [vmem:[%s242 + $0xc8] sm:$0xff] %vm2239, %v1944
        %2266 = vst.msk [vmem:[%s242 + $0xd0] sm:$0xff] %vm2239, %v1945
        %2267 = vst.msk [vmem:[%s242 + $0xd8] sm:$0xff] %vm2239, %v1946
        %2268 = vst.msk [vmem:[%s242 + $0xe0] sm:$0xff] %vm2239, %v1947
        %2269 = vst.msk [vmem:[%s242 + $0xe8] sm:$0xff] %vm2239, %v1948
        %2270 = vst.msk [vmem:[%s242 + $0xf0] sm:$0xff] %vm2239, %v1949
        %2271 = vst.msk [vmem:[%s242 + $0xf8] sm:$0xff] %vm2239, %v1950
        %2272 = vst.msk [vmem:[%s242 + $0x100] sm:$0xff] %vm2239, %v1951
        %2273 = vst.msk [vmem:[%s242 + $0x108] sm:$0xff] %vm2239, %v1952
        %2274 = vst.msk [vmem:[%s242 + $0x110] sm:$0xff] %vm2239, %v1953
        %2275 = vst.msk [vmem:[%s242 + $0x118] sm:$0xff] %vm2239, %v1954
        %2276 = vst.msk [vmem:[%s242 + $0x120] sm:$0xff] %vm2239, %v1955
        %2277 = vst.msk [vmem:[%s242 + $0x128] sm:$0xff] %vm2239, %v1956
        %2278 = vst.msk [vmem:[%s242 + $0x130] sm:$0xff] %vm2239, %v1957
        %2279 = vst.msk [vmem:[%s242 + $0x138] sm:$0xff] %vm2239, %v1958
        %2280 = vst.msk [vmem:[%s242 + $0x140] sm:$0xff] %vm2239, %v1959
        %2281 = vst.msk [vmem:[%s242 + $0x148] sm:$0xff] %vm2239, %v1960
        %2282 = vst.msk [vmem:[%s242 + $0x150] sm:$0xff] %vm2239, %v1961
        %2283 = vst.msk [vmem:[%s242 + $0x158] sm:$0xff] %vm2239, %v1962
        %2284 = vst.msk [vmem:[%s242 + $0x160] sm:$0xff] %vm2239, %v1963
        %2285 = vst.msk [vmem:[%s242 + $0x168] sm:$0xff] %vm2239, %v1964
        %2286 = vst.msk [vmem:[%s242 + $0x170] sm:$0xff] %vm2239, %v1965
        %2287 = vst.msk [vmem:[%s242 + $0x178] sm:$0xff] %vm2239, %v1966
        %2288 = vst.msk [vmem:[%s242 + $0x180] sm:$0xff] %vm2239, %v1967
        %2289 = vst.msk [vmem:[%s242 + $0x188] sm:$0xff] %vm2239, %v1968
        %2290 = vst.msk [vmem:[%s242 + $0x190] sm:$0xff] %vm2239, %v1969
        %2291 = vst.msk [vmem:[%s242 + $0x198] sm:$0xff] %vm2239, %v1970
        %2292 = vst.msk [vmem:[%s242 + $0x1a0] sm:$0xff] %vm2239, %v1971
        %2293 = vst.msk [vmem:[%s242 + $0x1a8] sm:$0xff] %vm2239, %v1972
        %2294 = vst.msk [vmem:[%s242 + $0x1b0] sm:$0xff] %vm2239, %v1973
        %2295 = vst.msk [vmem:[%s242 + $0x1b8] sm:$0xff] %vm2239, %v1974
        %2296 = vst.msk [vmem:[%s242 + $0x1c0] sm:$0xff] %vm2239, %v1975
        %2297 = vst.msk [vmem:[%s242 + $0x1c8] sm:$0xff] %vm2239, %v1976
        %2298 = vst.msk [vmem:[%s242 + $0x1d0] sm:$0xff] %vm2239, %v1977
        %2299 = vst.msk [vmem:[%s242 + $0x1d8] sm:$0xff] %vm2239, %v1978
        %2300 = vst.msk [vmem:[%s242 + $0x1e0] sm:$0xff] %vm2239, %v1979
        %2301 = vst.msk [vmem:[%s242 + $0x1e8] sm:$0xff] %vm2239, %v1980
        %2302 = vst.msk [vmem:[%s242 + $0x1f0] sm:$0xff] %vm2239, %v1981
        %2303 = vst.msk [vmem:[%s242 + $0x1f8] sm:$0xff] %vm2239, %v1982
        %s2304 = sand.u32 %s99, 1
        %s2305 = scalar_lea.sflag [#allocation4], %s2304
        %s2306 = sand.u32 %s99, 1
        %s2307 = smul.addr %s2306, 512
        %s2308 = scalar_lea.vmem [#allocation7], %s2307
        %s2309 = smul.u32 64, %s23
        %p2310 = scmp.lt.s32.totalorder %s2309, 127
        %s2311 = scalar_select %p2310, %s2309, 127
        %s2312 = smul.addr %s2311, 8
        %s2313 = scalar_lea.vmem %s4, %s2312
        // Predicated region
        $region41: #{tpu_custom_call.1} parent=31 // pred_check
          %p2314 = pneg %p109
        $region42: #{tpu_custom_call.1} parent=31 // pred_check_branch
          %2316 = sbr.rel (%p2314) target = $region44
        $region43: #{tpu_custom_call.1} parent=31 // pred_region
          %s2317 = smul.u32 64, %s23
          %s2319 = ssub.s32 8192, 8192
          %2320 = vsyncadd %s2305, %s2319
          %s2321 = smul.addr %s2317, 128
          %s2322 = scalar_lea.hbm %s3, %s2321
          %s2323 = sshll.u32 %s2308, 4
          %s2324 = int_to_ptr.vmem [resolvable:$true] %s2323
          %2329 = dma.vmem_to_hbm [thread:$0]  %s2324, 8192, %s2322, %s2305, 128, 128, 8
        $region44: #{tpu_custom_call.1} parent=31 // pred_fallthru
          _
        // Predicated region
        $region45: #{tpu_custom_call.1} parent=31 // pred_check
          %p2330 = pneg %p135
        $region46: #{tpu_custom_call.1} parent=31 // pred_check_branch
          %2332 = sbr.rel (%p2330) target = $region48
        $region47: #{tpu_custom_call.1} parent=31 // pred_region
          %s2333 = smul.u32 64, %s23
        $region48: #{tpu_custom_call.1} parent=31 // pred_fallthru
          _
      $region32: #{tpu_custom_call.1} parent=5 // pred_fallthru
        _
      %p2334 = scmp.le.s32.totalorder 2, %s18
      // Predicated region
      $region49: #{tpu_custom_call.1} parent=5 // pred_check
        %p2335 = pneg %p2334
      $region50: #{tpu_custom_call.1} parent=5 // pred_check_branch
        %2337 = sbr.rel (%p2335) target = $region52
      $region51: #{tpu_custom_call.1} parent=5 // pred_region
        %s2338 = ssub.s32 %s18, 2
        // Predicated region
        $region53: #{tpu_custom_call.1} parent=51 // pred_check
          %p2339 = pneg %p115
        $region54: #{tpu_custom_call.1} parent=51 // pred_check_branch
          %2341 = sbr.rel (%p2339) target = $region56
        $region55: #{tpu_custom_call.1} parent=51 // pred_region
          %s2342 = sand.u32 %s100, 1
          %s2343 = scalar_lea.sflag [#allocation4], %s2342
          %s2344 = sand.u32 %s100, 1
          %s2345 = smul.addr %s2344, 512
          %s2346 = scalar_lea.vmem [#allocation7], %s2345
          %2347 = dma.done %s2343, 8192
        $region56: #{tpu_custom_call.1} parent=51 // pred_fallthru
          _
        // Predicated region
        $region57: #{tpu_custom_call.1} parent=51 // pred_check
          %p2348 = pneg %p141
        $region58: #{tpu_custom_call.1} parent=51 // pred_check_branch
          %2350 = sbr.rel (%p2348) target = $region60
        $region59: #{tpu_custom_call.1} parent=51 // pred_region
          %s2351 = smul.u32 64, %s24
          %p2352 = scmp.lt.s32.totalorder %s2351, 127
          %s2353 = scalar_select %p2352, %s2351, 127
          %s2354 = smul.addr %s2353, 8
          %s2355 = scalar_lea.vmem %s4, %s2354
        $region60: #{tpu_custom_call.1} parent=51 // pred_fallthru
          _
      $region52: #{tpu_custom_call.1} parent=5 // pred_fallthru
        _
    $region6: #{tpu_custom_call.1} parent=1 // loop_footer
      %s22 = sadd.s32 1, %s18
    $region7: #{tpu_custom_call.1} parent=1 // loop_footer_branch
      %17 = sbr.rel target = $region3
    $region8: #{tpu_custom_call.1} parent=1 // loop_exit
      _
    %2356 = vsyncpa [#allocation3], 1
    %s2357 = scalar_lea.sflag [#allocation3], 1
    %2358 = vsyncpa %s2357, 1
    %2359 = vsyncpa [#allocation4], 1
    %s2360 = scalar_lea.sflag [#allocation4], 1
    %2361 = vsyncpa %s2360, 1
    %2362 = vsyncpa [#allocation5], 1
    %s2363 = scalar_lea.sflag [#allocation5], 1
    %2364 = vsyncpa %s2363, 1

</llo_original>
